<compile_context>
chip_gen: v6e
topology: v6e:2x2x1
jax: 0.10.0
libtpu: 0.0.40
codegen_flags: <defaults>
</compile_context>

<pallas_src>
import math
import functools

import jax
import jax.numpy as jnp
from jax.experimental import pallas as pl
from jax.experimental.pallas import tpu as pltpu


def _attention_ca_kernel(
    a_ref, b_ref,                       # [1, S, H] each (A = query side, B = key/value side)
    wq_ref, bq_ref,                     # [H, H], [1, H]
    wkv_ref, bkv_ref,                   # [H, 2H], [1, 2H]   (fused K|V projection)
    wo_ref, bo_ref,                     # [nh, dh, H], [1, H]  (SelfOutput dense, head-split)
    gamma_ref, beta_ref,                # LayerNorm params  [1, H]
    out_ref,                            # [1, S, H]
    probs_ref,                          # [1, num_heads, S, S]
    *, num_heads, head_size, hidden, eps,
):
    a = a_ref[0].astype(jnp.float32)            # [S, H]
    b = b_ref[0].astype(jnp.float32)            # [S, H]
    S = a.shape[0]

    # --- projections (MXU): Q from A, fused K|V from B -----------------------
    q = jnp.dot(a, wq_ref[...], preferred_element_type=jnp.float32) + bq_ref[0]
    kv = jnp.dot(b, wkv_ref[...], preferred_element_type=jnp.float32) + bkv_ref[0]
    k = kv[:, :hidden]
    v = kv[:, hidden:]

    # --- split heads: [S, H] -> [nh, S, dh] ----------------------------------
    qh = jnp.swapaxes(q.reshape(S, num_heads, head_size), 0, 1)
    kh = jnp.swapaxes(k.reshape(S, num_heads, head_size), 0, 1)
    vh = jnp.swapaxes(v.reshape(S, num_heads, head_size), 0, 1)

    inv_sqrt_d = 1.0 / math.sqrt(head_size)

    # --- scaled dot-product attention, heads batched (no per-head .T) --------
    scores = jnp.einsum('hqd,hkd->hqk', qh, kh,
                        preferred_element_type=jnp.float32) * inv_sqrt_d
    scores = scores - jnp.max(scores, axis=-1, keepdims=True)
    e = jnp.exp(scores)
    denom = jnp.sum(e, axis=-1, keepdims=True)
    probs = e * pl.reciprocal(denom, approx=False)            # softmax(dim=-1)
    probs_ref[0] = probs.astype(probs_ref.dtype)              # attention_probs_0

    # dropout(attention_probs) == identity in eval mode
    ctx = jnp.einsum('hqk,hkd->hqd', probs, vh,
                     preferred_element_type=jnp.float32)      # [nh, S, dh]

    # --- SelfOutput dense folded per head (no lane-axis concatenate) ---------
    # hid[q, o] = sum_h sum_d ctx[h,q,d] * Wo[h*dh + d, o]
    hid = jnp.einsum('hqd,hdo->hqo', ctx, wo_ref[...],
                     preferred_element_type=jnp.float32).sum(axis=0) + bo_ref[0]

    # dropout(hid) == identity; residual add + LayerNorm
    x = hid + a
    u = jnp.mean(x, axis=-1, keepdims=True)
    s = jnp.mean((x - u) * (x - u), axis=-1, keepdims=True)
    xn = (x - u) * jax.lax.rsqrt(s + eps)                      # EUP rsqrt
    out_ref[0] = (gamma_ref[0] * xn + beta_ref[0]).astype(out_ref.dtype)


def _fused_cross_attn(a_stack, b_stack, params, *, num_heads):
    """Single pallas_call over both directions: grid = (2B,)."""
    G, S, H = a_stack.shape
    head_size = H // num_heads

    # One-time (wrapper side) weight prep: fuse K|V, head-split the output proj.
    wkv = jnp.concatenate([params["wk"], params["wv"]], axis=1)     # [H, 2H]
    bkv = jnp.concatenate([params["bk"], params["bv"]], axis=1)     # [1, 2H]
    wo_r = params["wo"].reshape(num_heads, head_size, H)            # [nh, dh, H]

    kernel = functools.partial(
        _attention_ca_kernel,
        num_heads=num_heads,
        head_size=head_size,
        hidden=H,
        eps=1e-12,
    )

    act_spec = pl.BlockSpec((1, S, H), lambda g: (g, 0, 0))
    wq_spec = pl.BlockSpec((H, H), lambda g: (0, 0))
    wkv_spec = pl.BlockSpec((H, 2 * H), lambda g: (0, 0))
    wo_spec = pl.BlockSpec((num_heads, head_size, H), lambda g: (0, 0, 0))
    vec_spec = pl.BlockSpec((1, H), lambda g: (0, 0))
    vec2_spec = pl.BlockSpec((1, 2 * H), lambda g: (0, 0))

    out_shapes = (
        jax.ShapeDtypeStruct((G, S, H), jnp.float32),
        jax.ShapeDtypeStruct((G, num_heads, S, S), jnp.float32),
    )
    out_specs = [
        pl.BlockSpec((1, S, H), lambda g: (g, 0, 0)),
        pl.BlockSpec((1, num_heads, S, S), lambda g: (g, 0, 0, 0)),
    ]

    return pl.pallas_call(
        kernel,
        out_shape=out_shapes,
        grid_spec=pltpu.PrefetchScalarGridSpec(
            num_scalar_prefetch=0,
            grid=(G,),
            in_specs=[
                act_spec, act_spec,          # A, B
                wq_spec, vec_spec,           # Wq, bq
                wkv_spec, vec2_spec,         # W[k|v], b[k|v]
                wo_spec, vec_spec,           # Wo (head-split), bo
                vec_spec, vec_spec,          # gamma, beta
            ],
            out_specs=out_specs,
        ),
        compiler_params=pltpu.CompilerParams(
            dimension_semantics=("parallel",)),
    )(
        a_stack, b_stack,
        params["wq"], params["bq"],
        wkv, bkv,
        wo_r, params["bo"],
        params["gamma"], params["beta"],
    )


def attention_ca_forward(cell, drug, params, *, num_heads):
    """Mirrors Attention_CA.forward: both cross-attention directions share weights.

    The two directions are stacked along batch so that weights are loaded once
    and the grid covers 2B independent (query, key/value) pairs.
    """
    B = cell.shape[0]
    a_stack = jnp.concatenate([cell, drug], axis=0)   # query side
    b_stack = jnp.concatenate([drug, cell], axis=0)   # key/value side
    out, probs = _fused_cross_attn(a_stack, b_stack, params, num_heads=num_heads)
    cell_out, drug_out = out[:B], out[B:]
    cell_probs, drug_probs = probs[:B], probs[B:]
    return cell_out, drug_out, cell_probs, drug_probs


def _reference(cell, drug, params, *, num_heads):
    """Pure-JAX reference of the PyTorch forward (eval mode) for validation."""
    H = cell.shape[-1]
    dh = H // num_heads

    def split_heads(x):  # [B,S,H] -> [B,heads,S,dh]
        B, S, _ = x.shape
        return x.reshape(B, S, num_heads, dh).transpose(0, 2, 1, 3)

    def one_dir(a, b):
        q = a @ params["wq"] + params["bq"][0]
        k = b @ params["wk"] + params["bk"][0]
        v = b @ params["wv"] + params["bv"][0]
        qh, kh, vh = split_heads(q), split_heads(k), split_heads(v)
        scores = jnp.einsum("bhqd,bhkd->bhqk", qh, kh) / math.sqrt(dh)
        probs = jax.nn.softmax(scores, axis=-1)
        ctx = jnp.einsum("bhqk,bhkd->bhqd", probs, vh)
        ctx = ctx.transpose(0, 2, 1, 3).reshape(a.shape)
        hid = ctx @ params["wo"] + params["bo"][0]
        x = hid + a
        u = jnp.mean(x, -1, keepdims=True)
        s = jnp.mean((x - u) ** 2, -1, keepdims=True)
        xn = (x - u) / jnp.sqrt(s + 1e-12)
        return params["gamma"][0] * xn + params["beta"][0], probs

    c_out, c_p = one_dir(cell, drug)
    d_out, d_p = one_dir(drug, cell)
    return c_out, d_out, c_p, d_p


def make_params(key, hidden_size):
    ks = jax.random.split(key, 8)
    scale = 1.0 / math.sqrt(hidden_size)
    H = hidden_size
    return {
        "wq": jax.random.normal(ks[0], (H, H), jnp.float32) * scale,
        "bq": jax.random.normal(ks[1], (1, H), jnp.float32) * 0.1,
        "wk": jax.random.normal(ks[2], (H, H), jnp.float32) * scale,
        "bk": jax.random.normal(ks[3], (1, H), jnp.float32) * 0.1,
        "wv": jax.random.normal(ks[4], (H, H), jnp.float32) * scale,
        "bv": jax.random.normal(ks[5], (1, H), jnp.float32) * 0.1,
        "wo": jax.random.normal(ks[6], (H, H), jnp.float32) * scale,
        "bo": jax.random.normal(ks[7], (1, H), jnp.float32) * 0.1,
        "gamma": jnp.ones((1, H), jnp.float32),
        "beta": jnp.zeros((1, H), jnp.float32),
    }


if __name__ == "__main__":
    B, S, H, num_heads = 2, 8, 32, 4

    key = jax.random.PRNGKey(0)
    k_cell, k_drug, k_params = jax.random.split(key, 3)
    cell = jax.random.normal(k_cell, (B, S, H), jnp.float32)
    drug = jax.random.normal(k_drug, (B, S, H), jnp.float32)
    params = make_params(k_params, H)

    outs = attention_ca_forward(cell, drug, params, num_heads=num_heads)
    outs = jax.block_until_ready(outs)

    refs = _reference(cell, drug, params, num_heads=num_heads)
    for o, r in zip(outs, refs):
        assert o.shape == r.shape, (o.shape, r.shape)
        assert jnp.allclose(o, r, atol=1e-4, rtol=1e-4), float(jnp.max(jnp.abs(o - r)))

    print("KERNEL_OK")
</pallas_src>

<mosaic_0001>
module attributes {stable_mosaic.version = 11 : i64} {
  func.func @_attention_ca_kernel(%arg0: i32, %arg1: memref<1x8x32xf32, #tpu.memory_space<vmem>>, %arg2: memref<1x8x32xf32, #tpu.memory_space<vmem>>, %arg3: memref<32x32xf32, #tpu.memory_space<vmem>>, %arg4: memref<1x32xf32, #tpu.memory_space<vmem>>, %arg5: memref<32x64xf32, #tpu.memory_space<vmem>>, %arg6: memref<1x64xf32, #tpu.memory_space<vmem>>, %arg7: memref<4x8x32xf32, #tpu.memory_space<vmem>>, %arg8: memref<1x32xf32, #tpu.memory_space<vmem>>, %arg9: memref<1x32xf32, #tpu.memory_space<vmem>>, %arg10: memref<1x32xf32, #tpu.memory_space<vmem>>, %arg11: memref<1x8x32xf32, #tpu.memory_space<vmem>>, %arg12: memref<1x4x8x8xf32, #tpu.memory_space<vmem>>) attributes {dimension_semantics = [#tpu.dimension_semantics<parallel>], iteration_bounds = array<i64: 4>, scalar_prefetch = 0 : i64, scratch_operands = 0 : i64, tpu.core_type = #tpu.core_type<tc>, window_params = [{transform_indices = @transform_0, window_bounds = array<i64: 1, 8, 32>}, {transform_indices = @transform_1, window_bounds = array<i64: 1, 8, 32>}, {pipeline_mode = #tpu.pipeline_mode<synchronous>, transform_indices = @transform_2, window_bounds = array<i64: 32, 32>}, {pipeline_mode = #tpu.pipeline_mode<synchronous>, transform_indices = @transform_3, window_bounds = array<i64: 1, 32>}, {pipeline_mode = #tpu.pipeline_mode<synchronous>, transform_indices = @transform_4, window_bounds = array<i64: 32, 64>}, {pipeline_mode = #tpu.pipeline_mode<synchronous>, transform_indices = @transform_5, window_bounds = array<i64: 1, 64>}, {pipeline_mode = #tpu.pipeline_mode<synchronous>, transform_indices = @transform_6, window_bounds = array<i64: 4, 8, 32>}, {pipeline_mode = #tpu.pipeline_mode<synchronous>, transform_indices = @transform_7, window_bounds = array<i64: 1, 32>}, {pipeline_mode = #tpu.pipeline_mode<synchronous>, transform_indices = @transform_8, window_bounds = array<i64: 1, 32>}, {pipeline_mode = #tpu.pipeline_mode<synchronous>, transform_indices = @transform_9, window_bounds = array<i64: 1, 32>}, {transform_indices = @transform_10, window_bounds = array<i64: 1, 8, 32>}, {transform_indices = @transform_11, window_bounds = array<i64: 1, 4, 8, 8>}]} {
    %c0 = arith.constant 0 : index
    %c0_0 = arith.constant 0 : index
    %c0_1 = arith.constant 0 : index
    %0 = vector.load %arg1[%c0, %c0_0, %c0_1] : memref<1x8x32xf32, #tpu.memory_space<vmem>>, vector<1x8x32xf32>
    %1 = vector.shape_cast %0 : vector<1x8x32xf32> to vector<8x32xf32>
    %c0_2 = arith.constant 0 : index
    %c0_3 = arith.constant 0 : index
    %c0_4 = arith.constant 0 : index
    %2 = vector.load %arg2[%c0_2, %c0_3, %c0_4] : memref<1x8x32xf32, #tpu.memory_space<vmem>>, vector<1x8x32xf32>
    %3 = vector.shape_cast %2 : vector<1x8x32xf32> to vector<8x32xf32>
    %c0_5 = arith.constant 0 : index
    %c0_6 = arith.constant 0 : index
    %4 = vector.load %arg3[%c0_5, %c0_6] : memref<32x32xf32, #tpu.memory_space<vmem>>, vector<32x32xf32>
    %cst = arith.constant dense<0.000000e+00> : vector<8x32xf32>
    %5 = tpu.matmul %1, %4, %cst {dimension_numbers = #tpu.dot_dimension_numbers<[1], [0], [0], [1], [0, 0, 1, 1], [], []>} : vector<8x32xf32>, vector<32x32xf32>, vector<8x32xf32> -> vector<8x32xf32>
    %c0_7 = arith.constant 0 : index
    %c0_8 = arith.constant 0 : index
    %6 = vector.load %arg4[%c0_7, %c0_8] : memref<1x32xf32, #tpu.memory_space<vmem>>, vector<1x32xf32>
    %7 = vector.shape_cast %6 : vector<1x32xf32> to vector<32xf32>
    %8 = vector.shape_cast %7 : vector<32xf32> to vector<1x32xf32>
    %9 = vector.broadcast %8 : vector<1x32xf32> to vector<8x32xf32>
    %10 = arith.addf %5, %9 : vector<8x32xf32>
    %c0_9 = arith.constant 0 : index
    %c0_10 = arith.constant 0 : index
    %11 = vector.load %arg5[%c0_9, %c0_10] : memref<32x64xf32, #tpu.memory_space<vmem>>, vector<32x64xf32>
    %cst_11 = arith.constant dense<0.000000e+00> : vector<8x64xf32>
    %12 = tpu.matmul %3, %11, %cst_11 {dimension_numbers = #tpu.dot_dimension_numbers<[1], [0], [0], [1], [0, 0, 1, 1], [], []>} : vector<8x32xf32>, vector<32x64xf32>, vector<8x64xf32> -> vector<8x64xf32>
    %c0_12 = arith.constant 0 : index
    %c0_13 = arith.constant 0 : index
    %13 = vector.load %arg6[%c0_12, %c0_13] : memref<1x64xf32, #tpu.memory_space<vmem>>, vector<1x64xf32>
    %14 = vector.shape_cast %13 : vector<1x64xf32> to vector<64xf32>
    %15 = vector.shape_cast %14 : vector<64xf32> to vector<1x64xf32>
    %16 = vector.broadcast %15 : vector<1x64xf32> to vector<8x64xf32>
    %17 = arith.addf %12, %16 : vector<8x64xf32>
    %18 = vector.extract_strided_slice %17 {offsets = [0, 0], sizes = [8, 32], strides = [1, 1]} : vector<8x64xf32> to vector<8x32xf32>
    %19 = vector.extract_strided_slice %17 {offsets = [0, 32], sizes = [8, 32], strides = [1, 1]} : vector<8x64xf32> to vector<8x32xf32>
    %20 = vector.shape_cast %10 : vector<8x32xf32> to vector<8x4x8xf32>
    %21 = tpu.transpose %20, [1, 0, 2] : vector<8x4x8xf32> -> vector<4x8x8xf32>
    %22 = vector.shape_cast %18 : vector<8x32xf32> to vector<8x4x8xf32>
    %23 = tpu.transpose %22, [1, 0, 2] : vector<8x4x8xf32> -> vector<4x8x8xf32>
    %24 = vector.shape_cast %19 : vector<8x32xf32> to vector<8x4x8xf32>
    %25 = tpu.transpose %24, [1, 0, 2] : vector<8x4x8xf32> -> vector<4x8x8xf32>
    "tpu.trace_start"() <{level = 10 : i32, message = "hqd,hkd->hqk"}> : () -> ()
    %cst_14 = arith.constant dense<0.000000e+00> : vector<4x8x8xf32>
    %26 = tpu.matmul %21, %23, %cst_14 {dimension_numbers = #tpu.dot_dimension_numbers<[2], [2], [1], [1], [0, 0, 0, 1, 1, 1], [0], [0]>} : vector<4x8x8xf32>, vector<4x8x8xf32>, vector<4x8x8xf32> -> vector<4x8x8xf32>
    "tpu.trace_stop"() : () -> ()
    %cst_15 = arith.constant 0.353553385 : f32
    %27 = vector.broadcast %cst_15 : f32 to vector<4x8x8xf32>
    %28 = arith.mulf %26, %27 : vector<4x8x8xf32>
    %cst_16 = arith.constant dense<0xFF800000> : vector<4x8xf32>
    %29 = vector.multi_reduction <maximumf>, %28, %cst_16 [2] : vector<4x8x8xf32> to vector<4x8xf32>
    %30 = vector.shape_cast %29 : vector<4x8xf32> to vector<4x8x1xf32>
    %31 = vector.broadcast %30 : vector<4x8x1xf32> to vector<4x8x8xf32>
    %32 = arith.subf %28, %31 : vector<4x8x8xf32>
    %33 = math.exp %32 : vector<4x8x8xf32>
    %cst_17 = arith.constant dense<0.000000e+00> : vector<4x8xf32>
    %34 = vector.multi_reduction <add>, %33, %cst_17 [2] : vector<4x8x8xf32> to vector<4x8xf32>
    %35 = vector.shape_cast %34 : vector<4x8xf32> to vector<4x8x1xf32>
    %36 = tpu.reciprocal %35 : vector<4x8x1xf32> -> vector<4x8x1xf32>
    %37 = vector.broadcast %36 : vector<4x8x1xf32> to vector<4x8x8xf32>
    %38 = arith.mulf %33, %37 : vector<4x8x8xf32>
    %c0_18 = arith.constant 0 : index
    %c0_19 = arith.constant 0 : index
    %c0_20 = arith.constant 0 : index
    %c0_21 = arith.constant 0 : index
    %39 = vector.load %arg12[%c0_18, %c0_19, %c0_20, %c0_21] : memref<1x4x8x8xf32, #tpu.memory_space<vmem>>, vector<1x4x8x8xf32>
    %40 = vector.shape_cast %39 : vector<1x4x8x8xf32> to vector<4x8x8xf32>
    %41 = vector.shape_cast %38 : vector<4x8x8xf32> to vector<1x4x8x8xf32>
    tpu.vector_store %arg12[%c0_18, %c0_19, %c0_20, %c0_21], %41 {strides = array<i32>} : memref<1x4x8x8xf32, #tpu.memory_space<vmem>>, vector<1x4x8x8xf32>,
    "tpu.trace_start"() <{level = 10 : i32, message = "hqk,hkd->hqd"}> : () -> ()
    %cst_22 = arith.constant dense<0.000000e+00> : vector<4x8x8xf32>
    %42 = tpu.matmul %38, %25, %cst_22 {dimension_numbers = #tpu.dot_dimension_numbers<[2], [1], [1], [2], [0, 0, 0, 1, 1, 2], [0], [0]>} : vector<4x8x8xf32>, vector<4x8x8xf32>, vector<4x8x8xf32> -> vector<4x8x8xf32>
    "tpu.trace_stop"() : () -> ()
    %c0_23 = arith.constant 0 : index
    %c0_24 = arith.constant 0 : index
    %c0_25 = arith.constant 0 : index
    %43 = vector.load %arg7[%c0_23, %c0_24, %c0_25] : memref<4x8x32xf32, #tpu.memory_space<vmem>>, vector<4x8x32xf32>
    "tpu.trace_start"() <{level = 10 : i32, message = "hqd,hdo->hqo"}> : () -> ()
    %cst_26 = arith.constant dense<0.000000e+00> : vector<4x8x32xf32>
    %44 = tpu.matmul %42, %43, %cst_26 {dimension_numbers = #tpu.dot_dimension_numbers<[2], [1], [1], [2], [0, 0, 0, 1, 1, 2], [0], [0]>} : vector<4x8x8xf32>, vector<4x8x32xf32>, vector<4x8x32xf32> -> vector<4x8x32xf32>
    "tpu.trace_stop"() : () -> ()
    %cst_27 = arith.constant dense<0.000000e+00> : vector<8x32xf32>
    %45 = vector.multi_reduction <add>, %44, %cst_27 [0] : vector<4x8x32xf32> to vector<8x32xf32>
    %c0_28 = arith.constant 0 : index
    %c0_29 = arith.constant 0 : index
    %46 = vector.load %arg8[%c0_28, %c0_29] : memref<1x32xf32, #tpu.memory_space<vmem>>, vector<1x32xf32>
    %47 = vector.shape_cast %46 : vector<1x32xf32> to vector<32xf32>
    %48 = vector.shape_cast %47 : vector<32xf32> to vector<1x32xf32>
    %49 = vector.broadcast %48 : vector<1x32xf32> to vector<8x32xf32>
    %50 = arith.addf %45, %49 : vector<8x32xf32>
    %51 = arith.addf %50, %1 : vector<8x32xf32>
    %cst_30 = arith.constant dense<0.000000e+00> : vector<8xf32>
    %52 = vector.multi_reduction <add>, %51, %cst_30 [1] : vector<8x32xf32> to vector<8xf32>
    %53 = vector.shape_cast %52 : vector<8xf32> to vector<8x1xf32>
    %cst_31 = arith.constant 3.200000e+01 : f32
    %54 = vector.broadcast %cst_31 : f32 to vector<8x1xf32>
    %55 = arith.divf %53, %54 : vector<8x1xf32>
    %56 = vector.broadcast %55 : vector<8x1xf32> to vector<8x32xf32>
    %57 = arith.subf %51, %56 : vector<8x32xf32>
    %58 = vector.broadcast %55 : vector<8x1xf32> to vector<8x32xf32>
    %59 = arith.subf %51, %58 : vector<8x32xf32>
    %60 = arith.mulf %57, %59 : vector<8x32xf32>
    %cst_32 = arith.constant dense<0.000000e+00> : vector<8xf32>
    %61 = vector.multi_reduction <add>, %60, %cst_32 [1] : vector<8x32xf32> to vector<8xf32>
    %62 = vector.shape_cast %61 : vector<8xf32> to vector<8x1xf32>
    %cst_33 = arith.constant 3.200000e+01 : f32
    %63 = vector.broadcast %cst_33 : f32 to vector<8x1xf32>
    %64 = arith.divf %62, %63 : vector<8x1xf32>
    %65 = vector.broadcast %55 : vector<8x1xf32> to vector<8x32xf32>
    %66 = arith.subf %51, %65 : vector<8x32xf32>
    %cst_34 = arith.constant 9.99999996E-13 : f32
    %67 = vector.broadcast %cst_34 : f32 to vector<8x1xf32>
    %68 = arith.addf %64, %67 : vector<8x1xf32>
    %69 = math.rsqrt %68 : vector<8x1xf32>
    %70 = vector.broadcast %69 : vector<8x1xf32> to vector<8x32xf32>
    %71 = arith.mulf %66, %70 : vector<8x32xf32>
    %c0_35 = arith.constant 0 : index
    %c0_36 = arith.constant 0 : index
    %72 = vector.load %arg9[%c0_35, %c0_36] : memref<1x32xf32, #tpu.memory_space<vmem>>, vector<1x32xf32>
    %73 = vector.shape_cast %72 : vector<1x32xf32> to vector<32xf32>
    %74 = vector.shape_cast %73 : vector<32xf32> to vector<1x32xf32>
    %75 = vector.broadcast %74 : vector<1x32xf32> to vector<8x32xf32>
    %76 = arith.mulf %75, %71 : vector<8x32xf32>
    %c0_37 = arith.constant 0 : index
    %c0_38 = arith.constant 0 : index
    %77 = vector.load %arg10[%c0_37, %c0_38] : memref<1x32xf32, #tpu.memory_space<vmem>>, vector<1x32xf32>
    %78 = vector.shape_cast %77 : vector<1x32xf32> to vector<32xf32>
    %79 = vector.shape_cast %78 : vector<32xf32> to vector<1x32xf32>
    %80 = vector.broadcast %79 : vector<1x32xf32> to vector<8x32xf32>
    %81 = arith.addf %76, %80 : vector<8x32xf32>
    %c0_39 = arith.constant 0 : index
    %c0_40 = arith.constant 0 : index
    %c0_41 = arith.constant 0 : index
    %82 = vector.load %arg11[%c0_39, %c0_40, %c0_41] : memref<1x8x32xf32, #tpu.memory_space<vmem>>, vector<1x8x32xf32>
    %83 = vector.shape_cast %82 : vector<1x8x32xf32> to vector<8x32xf32>
    %84 = vector.shape_cast %81 : vector<8x32xf32> to vector<1x8x32xf32>
    tpu.vector_store %arg11[%c0_39, %c0_40, %c0_41], %84 {strides = array<i32>} : memref<1x8x32xf32, #tpu.memory_space<vmem>>, vector<1x8x32xf32>,
    return
  }
  func.func @transform_0(%arg0: i32) -> (i32, i32, i32) {
    %c0_i32 = arith.constant 0 : i32
    %c0_i32_0 = arith.constant 0 : i32
    %c0_i32_1 = arith.constant 0 : i32
    return %arg0, %c0_i32, %c0_i32_0 : i32, i32, i32
  }
  func.func @transform_1(%arg0: i32) -> (i32, i32, i32) {
    %c0_i32 = arith.constant 0 : i32
    %c0_i32_0 = arith.constant 0 : i32
    %c0_i32_1 = arith.constant 0 : i32
    return %arg0, %c0_i32, %c0_i32_0 : i32, i32, i32
  }
  func.func @transform_2(%arg0: i32) -> (i32, i32) {
    %c0_i32 = arith.constant 0 : i32
    %c0_i32_0 = arith.constant 0 : i32
    %c0_i32_1 = arith.constant 0 : i32
    return %c0_i32, %c0_i32_0 : i32, i32
  }
  func.func @transform_3(%arg0: i32) -> (i32, i32) {
    %c0_i32 = arith.constant 0 : i32
    %c0_i32_0 = arith.constant 0 : i32
    %c0_i32_1 = arith.constant 0 : i32
    return %c0_i32, %c0_i32_0 : i32, i32
  }
  func.func @transform_4(%arg0: i32) -> (i32, i32) {
    %c0_i32 = arith.constant 0 : i32
    %c0_i32_0 = arith.constant 0 : i32
    %c0_i32_1 = arith.constant 0 : i32
    return %c0_i32, %c0_i32_0 : i32, i32
  }
  func.func @transform_5(%arg0: i32) -> (i32, i32) {
    %c0_i32 = arith.constant 0 : i32
    %c0_i32_0 = arith.constant 0 : i32
    %c0_i32_1 = arith.constant 0 : i32
    return %c0_i32, %c0_i32_0 : i32, i32
  }
  func.func @transform_6(%arg0: i32) -> (i32, i32, i32) {
    %c0_i32 = arith.constant 0 : i32
    %c0_i32_0 = arith.constant 0 : i32
    %c0_i32_1 = arith.constant 0 : i32
    %c0_i32_2 = arith.constant 0 : i32
    return %c0_i32, %c0_i32_0, %c0_i32_1 : i32, i32, i32
  }
  func.func @transform_7(%arg0: i32) -> (i32, i32) {
    %c0_i32 = arith.constant 0 : i32
    %c0_i32_0 = arith.constant 0 : i32
    %c0_i32_1 = arith.constant 0 : i32
    return %c0_i32, %c0_i32_0 : i32, i32
  }
  func.func @transform_8(%arg0: i32) -> (i32, i32) {
    %c0_i32 = arith.constant 0 : i32
    %c0_i32_0 = arith.constant 0 : i32
    %c0_i32_1 = arith.constant 0 : i32
    return %c0_i32, %c0_i32_0 : i32, i32
  }
  func.func @transform_9(%arg0: i32) -> (i32, i32) {
    %c0_i32 = arith.constant 0 : i32
    %c0_i32_0 = arith.constant 0 : i32
    %c0_i32_1 = arith.constant 0 : i32
    return %c0_i32, %c0_i32_0 : i32, i32
  }
  func.func @transform_10(%arg0: i32) -> (i32, i32, i32) {
    %c0_i32 = arith.constant 0 : i32
    %c0_i32_0 = arith.constant 0 : i32
    %c0_i32_1 = arith.constant 0 : i32
    return %arg0, %c0_i32, %c0_i32_0 : i32, i32, i32
  }
  func.func @transform_11(%arg0: i32) -> (i32, i32, i32, i32) {
    %c0_i32 = arith.constant 0 : i32
    %c0_i32_0 = arith.constant 0 : i32
    %c0_i32_1 = arith.constant 0 : i32
    %c0_i32_2 = arith.constant 0 : i32
    return %arg0, %c0_i32, %c0_i32_0, %c0_i32_1 : i32, i32, i32, i32
  }
}

</mosaic_0001>

<llo_original>
// kernel: tpu_custom_call.1
$region0: #{tpu_custom_call.1}
  #allocation0 [shape = 'u32[]', space=smem, size = 0x4, offset = 0x4, fixed_abs, tag = 'smem constant byte address 0x4 - core index']
  #allocation1 [shape = 'u32[144,128]{1,0:T(1,128)}', space=vmem, size = 0x12000, scoped, tag = 'internal scratch']
  %s0 = inlined_call_operand.hbm [shape: f32[4,8,32], index: 0, kind: input, shape index: {}]
  %s1 = inlined_call_operand.hbm [shape: f32[4,8,32], index: 1, kind: input, shape index: {}]
  %s2 = inlined_call_operand.hbm [shape: f32[32,32], index: 2, kind: input, shape index: {}]
  %s3 = inlined_call_operand.vmem [shape: f32[1,32], index: 3, kind: input, shape index: {}]
  %s4 = inlined_call_operand.hbm [shape: f32[32,64], index: 4, kind: input, shape index: {}]
  %s5 = inlined_call_operand.vmem [shape: f32[1,64], index: 5, kind: input, shape index: {}]
  %s6 = inlined_call_operand.hbm [shape: f32[4,8,32], index: 6, kind: input, shape index: {}]
  %s7 = inlined_call_operand.vmem [shape: f32[1,32], index: 7, kind: input, shape index: {}]
  %s8 = inlined_call_operand.vmem [shape: f32[1,32], index: 8, kind: input, shape index: {}]
  %s9 = inlined_call_operand.vmem [shape: f32[1,32], index: 9, kind: input, shape index: {}]
  %s10 = inlined_call_operand.hbm [shape: f32[4,8,32], index: 10, kind: output, shape index: {0}]
  %s11 = inlined_call_operand.hbm [shape: f32[4,4,8,8], index: 11, kind: output, shape index: {1}]
  %12 = xla_tuple %s10, %s11
  %s13 = sld [smem:[#allocation0]]
  $region101: #{tpu_custom_call.1} parent=0
    _
  %s15 = ssub.s32 1, %s13
  %s16 = scalar_select 0, %s15, %s13
  $region1: #{tpu_custom_call.1} parent=0
    #allocation2 [shape = 'u8[8192]{0}', space=vmem, size = 0x2000, scoped, tag = 'input window, operand 0']
    #allocation3 [shape = 's32[2]{0}', space=sflag, size = 0x8, scoped, tag = 'scoped memory for tpu_custom_call.1']
    #allocation4 [shape = 's32[2]{0}', space=sflag, size = 0x8, scoped, tag = 'scoped memory for tpu_custom_call.1']
    #allocation5 [shape = 'u8[8192]{0}', space=vmem, size = 0x2000, scoped, tag = 'input window, operand 1']
    #allocation6 [shape = 's32[2]{0}', space=sflag, size = 0x8, scoped, tag = 'scoped memory for tpu_custom_call.1']
    #allocation7 [shape = 'u8[16384]{0}', space=vmem, size = 0x4000, scoped, tag = 'input window, operand 2, single buffered']
    #allocation8 [shape = 'u8[16384]{0}', space=vmem, size = 0x4000, scoped, tag = 'input window, operand 4, single buffered']
    #allocation9 [shape = 's32[1]{0}', space=sflag, size = 0x4, scoped, tag = 'scoped memory for tpu_custom_call.1']
    #allocation10 [shape = 'u8[16384]{0}', space=vmem, size = 0x4000, scoped, tag = 'input window, operand 6, single buffered']
    #allocation11 [shape = 'u8[8192]{0}', space=vmem, size = 0x2000, scoped, tag = 'output window, operand 0']
    #allocation12 [shape = 'u8[32768]{0}', space=vmem, size = 0x8000, scoped, tag = 'output window, operand 1']
    #allocation13 [shape = 's32[2]{0}', space=sflag, size = 0x8, scoped, tag = 'scoped memory for tpu_custom_call.1']
    %17 = vsyncpa [#allocation3], 0
    %s18 = scalar_lea.sflag [#allocation3], 1
    %19 = vsyncpa %s18, 0
    %20 = vsyncpa [#allocation6], 0
    %s21 = scalar_lea.sflag [#allocation6], 1
    %22 = vsyncpa %s21, 0
    %23 = vsyncpa [#allocation9], 0
    %24 = vsyncpa [#allocation4], 0
    %s25 = scalar_lea.sflag [#allocation4], 1
    %26 = vsyncpa %s25, 0
    %27 = vsyncpa [#allocation13], 0
    %s28 = scalar_lea.sflag [#allocation13], 1
    %29 = vsyncpa %s28, 0
    loop: start=0, step=1, limit=6
    $region2: #{tpu_custom_call.1} parent=1 // loop_pre_header
      _
    $region3: #{tpu_custom_call.1} parent=1 // loop_header
      %s31 = sphi 0, %s35
      %p32 = scmp.ge.s32.totalorder %s31, 6
      %s41 = sphi 0, %s43
      %s44 = sphi 0, %s41
      %s45 = sphi 0, %s44
      %s61 = sphi 0, %s45
      %s67 = sphi 0, %s69
      %s70 = sphi 0, %s67
      %s71 = sphi 0, %s70
      %s87 = sphi 0, %s71
      %s91 = sphi 0, %s91
      %s93 = sphi 0, %s91
      %s94 = sphi 0, %s93
      %s108 = sphi 0, %s94
      %s112 = sphi 0, %s112
      %s114 = sphi 0, %s112
      %s115 = sphi 0, %s114
      %s129 = sphi 0, %s115
      %s133 = sphi 0, %s133
      %s135 = sphi 0, %s133
      %s136 = sphi 0, %s135
      %s150 = sphi 0, %s136
      %s154 = sphi 0, %s154
      %s156 = sphi 0, %s154
      %s157 = sphi 0, %s156
      %s171 = sphi 0, %s157
      %s175 = sphi 0, %s175
      %s177 = sphi 0, %s175
      %s178 = sphi 0, %s177
      %s192 = sphi 0, %s178
      %s196 = sphi 0, %s196
      %s198 = sphi 0, %s196
      %s199 = sphi 0, %s198
      %s213 = sphi 0, %s199
      %s217 = sphi 0, %s217
      %s219 = sphi 0, %s217
      %s220 = sphi 0, %s219
      %s234 = sphi 0, %s220
      %s238 = sphi 0, %s238
      %s240 = sphi 0, %s238
      %s241 = sphi 0, %s240
      %s255 = sphi 0, %s241
      %s261 = sphi 0, %s263
      %s264 = sphi 0, %s261
      %s265 = sphi 0, %s264
      %s281 = sphi 0, %s265
      %s287 = sphi 0, %s289
      %s290 = sphi 0, %s287
      %s291 = sphi 0, %s290
      %s307 = sphi 0, %s291
    $region4: #{tpu_custom_call.1} parent=1 // loop_header_branch
      %34 = sbr.rel (%p32) target = $region8
    $region5: #{tpu_custom_call.1} parent=1 // loop_body
      %s36 = ssub.s32 %s31, 1
      %s37 = ssub.s32 %s31, 2
      %s38 = sadd.s32 %s31, 1
      %s39 = ssub.s32 %s31, %s38
      %p40 = scmp.eq.s32.totalorder %s39, 0
      %s42 = sadd.s32 %s41, 1
      %s43 = scalar_select %p40, %s41, %s42
      %p46 = pneg %p40
      %p47 = scmp.eq.s32.totalorder %s31, 3
      %p48 = por %p46, %p47
      %p49 = scmp.ne.s32.totalorder %s41, %s44
      %p50 = scmp.eq.s32.totalorder %s31, 0
      %p51 = por %p49, %p50
      %p52 = scmp.ne.s32.totalorder %s41, %s44
      %p53 = scmp.eq.s32.totalorder %s36, 3
      %p54 = por %p52, %p53
      %p55 = scmp.ne.s32.totalorder %s44, %s45
      %p56 = scmp.eq.s32.totalorder %s36, 0
      %p57 = por %p55, %p56
      %p58 = scmp.ne.s32.totalorder %s44, %s45
      %p59 = scmp.eq.s32.totalorder %s37, 3
      %p60 = por %p58, %p59
      %p62 = scmp.ne.s32.totalorder %s45, %s61
      %p63 = scmp.eq.s32.totalorder %s37, 0
      %p64 = por %p62, %p63
      %s65 = ssub.s32 %s31, %s38
      %p66 = scmp.eq.s32.totalorder %s65, 0
      %s68 = sadd.s32 %s67, 1
      %s69 = scalar_select %p66, %s67, %s68
      %p72 = pneg %p66
      %p73 = scmp.eq.s32.totalorder %s31, 3
      %p74 = por %p72, %p73
      %p75 = scmp.ne.s32.totalorder %s67, %s70
      %p76 = scmp.eq.s32.totalorder %s31, 0
      %p77 = por %p75, %p76
      %p78 = scmp.ne.s32.totalorder %s67, %s70
      %p79 = scmp.eq.s32.totalorder %s36, 3
      %p80 = por %p78, %p79
      %p81 = scmp.ne.s32.totalorder %s70, %s71
      %p82 = scmp.eq.s32.totalorder %s36, 0
      %p83 = por %p81, %p82
      %p84 = scmp.ne.s32.totalorder %s70, %s71
      %p85 = scmp.eq.s32.totalorder %s37, 3
      %p86 = por %p84, %p85
      %p88 = scmp.ne.s32.totalorder %s71, %s87
      %p89 = scmp.eq.s32.totalorder %s37, 0
      %p90 = por %p88, %p89
      %s92 = sadd.s32 %s91, 1
      %p95 = scmp.eq.s32.totalorder %s31, 3
      %p96 = scmp.ne.s32.totalorder %s91, %s93
      %p97 = scmp.eq.s32.totalorder %s31, 0
      %p98 = por %p96, %p97
      %p99 = scmp.ne.s32.totalorder %s91, %s93
      %p100 = scmp.eq.s32.totalorder %s36, 3
      %p101 = por %p99, %p100
      %p102 = scmp.ne.s32.totalorder %s93, %s94
      %p103 = scmp.eq.s32.totalorder %s36, 0
      %p104 = por %p102, %p103
      %p105 = scmp.ne.s32.totalorder %s93, %s94
      %p106 = scmp.eq.s32.totalorder %s37, 3
      %p107 = por %p105, %p106
      %p109 = scmp.ne.s32.totalorder %s94, %s108
      %p110 = scmp.eq.s32.totalorder %s37, 0
      %p111 = por %p109, %p110
      %s113 = sadd.s32 %s112, 1
      %p116 = scmp.eq.s32.totalorder %s31, 3
      %p117 = scmp.ne.s32.totalorder %s112, %s114
      %p118 = scmp.eq.s32.totalorder %s31, 0
      %p119 = por %p117, %p118
      %p120 = scmp.ne.s32.totalorder %s112, %s114
      %p121 = scmp.eq.s32.totalorder %s36, 3
      %p122 = por %p120, %p121
      %p123 = scmp.ne.s32.totalorder %s114, %s115
      %p124 = scmp.eq.s32.totalorder %s36, 0
      %p125 = por %p123, %p124
      %p126 = scmp.ne.s32.totalorder %s114, %s115
      %p127 = scmp.eq.s32.totalorder %s37, 3
      %p128 = por %p126, %p127
      %p130 = scmp.ne.s32.totalorder %s115, %s129
      %p131 = scmp.eq.s32.totalorder %s37, 0
      %p132 = por %p130, %p131
      %s134 = sadd.s32 %s133, 1
      %p137 = scmp.eq.s32.totalorder %s31, 3
      %p138 = scmp.ne.s32.totalorder %s133, %s135
      %p139 = scmp.eq.s32.totalorder %s31, 0
      %p140 = por %p138, %p139
      %p141 = scmp.ne.s32.totalorder %s133, %s135
      %p142 = scmp.eq.s32.totalorder %s36, 3
      %p143 = por %p141, %p142
      %p144 = scmp.ne.s32.totalorder %s135, %s136
      %p145 = scmp.eq.s32.totalorder %s36, 0
      %p146 = por %p144, %p145
      %p147 = scmp.ne.s32.totalorder %s135, %s136
      %p148 = scmp.eq.s32.totalorder %s37, 3
      %p149 = por %p147, %p148
      %p151 = scmp.ne.s32.totalorder %s136, %s150
      %p152 = scmp.eq.s32.totalorder %s37, 0
      %p153 = por %p151, %p152
      %s155 = sadd.s32 %s154, 1
      %p158 = scmp.eq.s32.totalorder %s31, 3
      %p159 = scmp.ne.s32.totalorder %s154, %s156
      %p160 = scmp.eq.s32.totalorder %s31, 0
      %p161 = por %p159, %p160
      %p162 = scmp.ne.s32.totalorder %s154, %s156
      %p163 = scmp.eq.s32.totalorder %s36, 3
      %p164 = por %p162, %p163
      %p165 = scmp.ne.s32.totalorder %s156, %s157
      %p166 = scmp.eq.s32.totalorder %s36, 0
      %p167 = por %p165, %p166
      %p168 = scmp.ne.s32.totalorder %s156, %s157
      %p169 = scmp.eq.s32.totalorder %s37, 3
      %p170 = por %p168, %p169
      %p172 = scmp.ne.s32.totalorder %s157, %s171
      %p173 = scmp.eq.s32.totalorder %s37, 0
      %p174 = por %p172, %p173
      %s176 = sadd.s32 %s175, 1
      %p179 = scmp.eq.s32.totalorder %s31, 3
      %p180 = scmp.ne.s32.totalorder %s175, %s177
      %p181 = scmp.eq.s32.totalorder %s31, 0
      %p182 = por %p180, %p181
      %p183 = scmp.ne.s32.totalorder %s175, %s177
      %p184 = scmp.eq.s32.totalorder %s36, 3
      %p185 = por %p183, %p184
      %p186 = scmp.ne.s32.totalorder %s177, %s178
      %p187 = scmp.eq.s32.totalorder %s36, 0
      %p188 = por %p186, %p187
      %p189 = scmp.ne.s32.totalorder %s177, %s178
      %p190 = scmp.eq.s32.totalorder %s37, 3
      %p191 = por %p189, %p190
      %p193 = scmp.ne.s32.totalorder %s178, %s192
      %p194 = scmp.eq.s32.totalorder %s37, 0
      %p195 = por %p193, %p194
      %s197 = sadd.s32 %s196, 1
      %p200 = scmp.eq.s32.totalorder %s31, 3
      %p201 = scmp.ne.s32.totalorder %s196, %s198
      %p202 = scmp.eq.s32.totalorder %s31, 0
      %p203 = por %p201, %p202
      %p204 = scmp.ne.s32.totalorder %s196, %s198
      %p205 = scmp.eq.s32.totalorder %s36, 3
      %p206 = por %p204, %p205
      %p207 = scmp.ne.s32.totalorder %s198, %s199
      %p208 = scmp.eq.s32.totalorder %s36, 0
      %p209 = por %p207, %p208
      %p210 = scmp.ne.s32.totalorder %s198, %s199
      %p211 = scmp.eq.s32.totalorder %s37, 3
      %p212 = por %p210, %p211
      %p214 = scmp.ne.s32.totalorder %s199, %s213
      %p215 = scmp.eq.s32.totalorder %s37, 0
      %p216 = por %p214, %p215
      %s218 = sadd.s32 %s217, 1
      %p221 = scmp.eq.s32.totalorder %s31, 3
      %p222 = scmp.ne.s32.totalorder %s217, %s219
      %p223 = scmp.eq.s32.totalorder %s31, 0
      %p224 = por %p222, %p223
      %p225 = scmp.ne.s32.totalorder %s217, %s219
      %p226 = scmp.eq.s32.totalorder %s36, 3
      %p227 = por %p225, %p226
      %p228 = scmp.ne.s32.totalorder %s219, %s220
      %p229 = scmp.eq.s32.totalorder %s36, 0
      %p230 = por %p228, %p229
      %p231 = scmp.ne.s32.totalorder %s219, %s220
      %p232 = scmp.eq.s32.totalorder %s37, 3
      %p233 = por %p231, %p232
      %p235 = scmp.ne.s32.totalorder %s220, %s234
      %p236 = scmp.eq.s32.totalorder %s37, 0
      %p237 = por %p235, %p236
      %s239 = sadd.s32 %s238, 1
      %p242 = scmp.eq.s32.totalorder %s31, 3
      %p243 = scmp.ne.s32.totalorder %s238, %s240
      %p244 = scmp.eq.s32.totalorder %s31, 0
      %p245 = por %p243, %p244
      %p246 = scmp.ne.s32.totalorder %s238, %s240
      %p247 = scmp.eq.s32.totalorder %s36, 3
      %p248 = por %p246, %p247
      %p249 = scmp.ne.s32.totalorder %s240, %s241
      %p250 = scmp.eq.s32.totalorder %s36, 0
      %p251 = por %p249, %p250
      %p252 = scmp.ne.s32.totalorder %s240, %s241
      %p253 = scmp.eq.s32.totalorder %s37, 3
      %p254 = por %p252, %p253
      %p256 = scmp.ne.s32.totalorder %s241, %s255
      %p257 = scmp.eq.s32.totalorder %s37, 0
      %p258 = por %p256, %p257
      %s259 = ssub.s32 %s31, %s38
      %p260 = scmp.eq.s32.totalorder %s259, 0
      %s262 = sadd.s32 %s261, 1
      %s263 = scalar_select %p260, %s261, %s262
      %p266 = pneg %p260
      %p267 = scmp.eq.s32.totalorder %s31, 3
      %p268 = por %p266, %p267
      %p269 = scmp.ne.s32.totalorder %s261, %s264
      %p270 = scmp.eq.s32.totalorder %s31, 0
      %p271 = por %p269, %p270
      %p272 = scmp.ne.s32.totalorder %s261, %s264
      %p273 = scmp.eq.s32.totalorder %s36, 3
      %p274 = por %p272, %p273
      %p275 = scmp.ne.s32.totalorder %s264, %s265
      %p276 = scmp.eq.s32.totalorder %s36, 0
      %p277 = por %p275, %p276
      %p278 = scmp.ne.s32.totalorder %s264, %s265
      %p279 = scmp.eq.s32.totalorder %s37, 3
      %p280 = por %p278, %p279
      %p282 = scmp.ne.s32.totalorder %s265, %s281
      %p283 = scmp.eq.s32.totalorder %s37, 0
      %p284 = por %p282, %p283
      %s285 = ssub.s32 %s31, %s38
      %p286 = scmp.eq.s32.totalorder %s285, 0
      %s288 = sadd.s32 %s287, 1
      %s289 = scalar_select %p286, %s287, %s288
      %p292 = pneg %p286
      %p293 = scmp.eq.s32.totalorder %s31, 3
      %p294 = por %p292, %p293
      %p295 = scmp.ne.s32.totalorder %s287, %s290
      %p296 = scmp.eq.s32.totalorder %s31, 0
      %p297 = por %p295, %p296
      %p298 = scmp.ne.s32.totalorder %s287, %s290
      %p299 = scmp.eq.s32.totalorder %s36, 3
      %p300 = por %p298, %p299
      %p301 = scmp.ne.s32.totalorder %s290, %s291
      %p302 = scmp.eq.s32.totalorder %s36, 0
      %p303 = por %p301, %p302
      %p304 = scmp.ne.s32.totalorder %s290, %s291
      %p305 = scmp.eq.s32.totalorder %s37, 3
      %p306 = por %p304, %p305
      %p308 = scmp.ne.s32.totalorder %s291, %s307
      %p309 = scmp.eq.s32.totalorder %s37, 0
      %p310 = por %p308, %p309
      %p311 = scmp.le.s32.totalorder 1, %s31
      %p312 = scmp.lt.s32.totalorder %s31, 5
      %p313 = pnand %p311, %p312
      %p314 = pneg %p313
      // Predicated region
      $region9: #{tpu_custom_call.1} parent=5 // pred_check
        _
      $region10: #{tpu_custom_call.1} parent=5 // pred_check_branch
        %316 = sbr.rel (%p313) target = $region12
      $region11: #{tpu_custom_call.1} parent=5 // pred_region
        %s317 = ssub.s32 %s31, 1
        // Predicated region
        $region13: #{tpu_custom_call.1} parent=11 // pred_check
          %p318 = pneg %p104
        $region14: #{tpu_custom_call.1} parent=11 // pred_check_branch
          %320 = sbr.rel (%p318) target = $region16
        $region15: #{tpu_custom_call.1} parent=11 // pred_region
          %s322 = ssub.s32 512, 512
          %323 = vsyncadd [#allocation6], %s322
          %s324 = sshll.u32 [#allocation7], 4
          %s325 = int_to_ptr.vmem [resolvable:$true] %s324
          %330 = dma.hbm_to_vmem [thread:$0]  %s2, 512, %s325, [#allocation6], 128, 128, 8
        $region16: #{tpu_custom_call.1} parent=11 // pred_fallthru
          _
        // Predicated region
        $region17: #{tpu_custom_call.1} parent=11 // pred_check
          %p331 = pneg %p125
        $region18: #{tpu_custom_call.1} parent=11 // pred_check_branch
          %333 = sbr.rel (%p331) target = $region20
        $region19: #{tpu_custom_call.1} parent=11 // pred_region
          _
        $region20: #{tpu_custom_call.1} parent=11 // pred_fallthru
          _
        // Predicated region
        $region21: #{tpu_custom_call.1} parent=11 // pred_check
          %p334 = pneg %p146
        $region22: #{tpu_custom_call.1} parent=11 // pred_check_branch
          %336 = sbr.rel (%p334) target = $region24
        $region23: #{tpu_custom_call.1} parent=11 // pred_region
          %s338 = ssub.s32 512, 512
          %339 = vsyncadd [#allocation9], %s338
          %s340 = sshll.u32 [#allocation8], 4
          %s341 = int_to_ptr.vmem [resolvable:$true] %s340
          %346 = dma.hbm_to_vmem [thread:$0]  %s4, 512, %s341, [#allocation9], 128, 128, 8
        $region24: #{tpu_custom_call.1} parent=11 // pred_fallthru
          _
        // Predicated region
        $region25: #{tpu_custom_call.1} parent=11 // pred_check
          %p347 = pneg %p167
        $region26: #{tpu_custom_call.1} parent=11 // pred_check_branch
          %349 = sbr.rel (%p347) target = $region28
        $region27: #{tpu_custom_call.1} parent=11 // pred_region
          _
        $region28: #{tpu_custom_call.1} parent=11 // pred_fallthru
          _
        // Predicated region
        $region29: #{tpu_custom_call.1} parent=11 // pred_check
          %p350 = pneg %p188
        $region30: #{tpu_custom_call.1} parent=11 // pred_check_branch
          %352 = sbr.rel (%p350) target = $region32
        $region31: #{tpu_custom_call.1} parent=11 // pred_region
          %s354 = ssub.s32 512, 512
          %355 = vsyncadd [#allocation9], %s354
          %s356 = sshll.u32 [#allocation10], 4
          %s357 = int_to_ptr.vmem [resolvable:$true] %s356
          %362 = dma.hbm_to_vmem [thread:$0]  %s6, 512, %s357, [#allocation9], 128, 128, 8
        $region32: #{tpu_custom_call.1} parent=11 // pred_fallthru
          _
        // Predicated region
        $region33: #{tpu_custom_call.1} parent=11 // pred_check
          %p363 = pneg %p209
        $region34: #{tpu_custom_call.1} parent=11 // pred_check_branch
          %365 = sbr.rel (%p363) target = $region36
        $region35: #{tpu_custom_call.1} parent=11 // pred_region
          _
        $region36: #{tpu_custom_call.1} parent=11 // pred_fallthru
          _
        // Predicated region
        $region37: #{tpu_custom_call.1} parent=11 // pred_check
          %p366 = pneg %p230
        $region38: #{tpu_custom_call.1} parent=11 // pred_check_branch
          %368 = sbr.rel (%p366) target = $region40
        $region39: #{tpu_custom_call.1} parent=11 // pred_region
          _
        $region40: #{tpu_custom_call.1} parent=11 // pred_fallthru
          _
        // Predicated region
        $region41: #{tpu_custom_call.1} parent=11 // pred_check
          %p369 = pneg %p251
        $region42: #{tpu_custom_call.1} parent=11 // pred_check_branch
          %371 = sbr.rel (%p369) target = $region44
        $region43: #{tpu_custom_call.1} parent=11 // pred_region
          _
        $region44: #{tpu_custom_call.1} parent=11 // pred_fallthru
          _
      $region12: #{tpu_custom_call.1} parent=5 // pred_fallthru
        _
      %p372 = scmp.lt.s32.totalorder %s31, 4
      // Predicated region
      $region45: #{tpu_custom_call.1} parent=5 // pred_check
        %p373 = pneg %p372
      $region46: #{tpu_custom_call.1} parent=5 // pred_check_branch
        %375 = sbr.rel (%p373) target = $region48
      $region47: #{tpu_custom_call.1} parent=5 // pred_region
        // Predicated region
        $region49: #{tpu_custom_call.1} parent=47 // pred_check
          %p376 = pneg %p51
        $region50: #{tpu_custom_call.1} parent=47 // pred_check_branch
          %378 = sbr.rel (%p376) target = $region52
        $region51: #{tpu_custom_call.1} parent=47 // pred_region
          %s379 = sand.u32 %s41, 1
          %s380 = scalar_lea.sflag [#allocation3], %s379
          %s381 = sand.u32 %s41, 1
          %s382 = smul.addr %s381, 8
          %s383 = scalar_lea.vmem [#allocation2], %s382
          %s385 = ssub.s32 128, 128
          %386 = vsyncadd %s380, %s385
          %s387 = smul.addr %s31, 128
          %s388 = scalar_lea.hbm %s0, %s387
          %s390 = sshll.u32 %s383, 4
          %s391 = int_to_ptr.vmem [resolvable:$true] %s390
          %393 = dma.hbm_to_vmem [thread:$0]  %s388, 128, %s391, %s380
        $region52: #{tpu_custom_call.1} parent=47 // pred_fallthru
          _
        // Predicated region
        $region53: #{tpu_custom_call.1} parent=47 // pred_check
          %p394 = pneg %p77
        $region54: #{tpu_custom_call.1} parent=47 // pred_check_branch
          %396 = sbr.rel (%p394) target = $region56
        $region55: #{tpu_custom_call.1} parent=47 // pred_region
          %s397 = sand.u32 %s31, 1
          %s398 = scalar_lea.sflag [#allocation6], %s397
          %s399 = sand.u32 %s67, 1
          %s400 = smul.addr %s399, 8
          %s401 = scalar_lea.vmem [#allocation5], %s400
          %s403 = ssub.s32 128, 128
          %404 = vsyncadd %s398, %s403
          %s405 = smul.addr %s31, 128
          %s406 = scalar_lea.hbm %s1, %s405
          %s408 = sshll.u32 %s401, 4
          %s409 = int_to_ptr.vmem [resolvable:$true] %s408
          %411 = dma.hbm_to_vmem [thread:$0]  %s406, 128, %s409, %s398
        $region56: #{tpu_custom_call.1} parent=47 // pred_fallthru
          _
      $region48: #{tpu_custom_call.1} parent=5 // pred_fallthru
        _
      %p412 = scmp.le.s32.totalorder 1, %s31
      %p413 = scmp.lt.s32.totalorder %s31, 5
      %p414 = pnand %p412, %p413
      %p415 = pneg %p414
      // Predicated region
      $region57: #{tpu_custom_call.1} parent=5 // pred_check
        _
      $region58: #{tpu_custom_call.1} parent=5 // pred_check_branch
        %417 = sbr.rel (%p414) target = $region60
      $region59: #{tpu_custom_call.1} parent=5 // pred_region
        %s418 = ssub.s32 %s31, 1
        %s419 = sand.u32 %s44, 1
        %s420 = scalar_lea.sflag [#allocation3], %s419
        %s421 = sand.u32 %s44, 1
        %s422 = smul.addr %s421, 8
        %s423 = scalar_lea.vmem [#allocation2], %s422
        // Predicated region
        $region61: #{tpu_custom_call.1} parent=59 // pred_check
          %p424 = pneg %p57
        $region62: #{tpu_custom_call.1} parent=59 // pred_check_branch
          %426 = sbr.rel (%p424) target = $region64
        $region63: #{tpu_custom_call.1} parent=59 // pred_region
          %427 = dma.done %s420, 128
        $region64: #{tpu_custom_call.1} parent=59 // pred_fallthru
          _
        %s428 = sand.u32 %s36, 1
        %s429 = scalar_lea.sflag [#allocation6], %s428
        %s430 = sand.u32 %s70, 1
        %s431 = smul.addr %s430, 8
        %s432 = scalar_lea.vmem [#allocation5], %s431
        // Predicated region
        $region65: #{tpu_custom_call.1} parent=59 // pred_check
          %p433 = pneg %p83
        $region66: #{tpu_custom_call.1} parent=59 // pred_check_branch
          %435 = sbr.rel (%p433) target = $region68
        $region67: #{tpu_custom_call.1} parent=59 // pred_region
          %436 = dma.done %s429, 128
        $region68: #{tpu_custom_call.1} parent=59 // pred_fallthru
          _
        // Predicated region
        $region69: #{tpu_custom_call.1} parent=59 // pred_check
          %p437 = pneg %p104
        $region70: #{tpu_custom_call.1} parent=59 // pred_check_branch
          %439 = sbr.rel (%p437) target = $region72
        $region71: #{tpu_custom_call.1} parent=59 // pred_region
          %440 = dma.done [#allocation6], 512
        $region72: #{tpu_custom_call.1} parent=59 // pred_fallthru
          _
        // Predicated region
        $region73: #{tpu_custom_call.1} parent=59 // pred_check
          %p441 = pneg %p146
        $region74: #{tpu_custom_call.1} parent=59 // pred_check_branch
          %443 = sbr.rel (%p441) target = $region76
        $region75: #{tpu_custom_call.1} parent=59 // pred_region
          %444 = dma.done [#allocation9], 512
        $region76: #{tpu_custom_call.1} parent=59 // pred_fallthru
          _
        // Predicated region
        $region77: #{tpu_custom_call.1} parent=59 // pred_check
          %p445 = pneg %p188
        $region78: #{tpu_custom_call.1} parent=59 // pred_check_branch
          %447 = sbr.rel (%p445) target = $region80
        $region79: #{tpu_custom_call.1} parent=59 // pred_region
          %448 = dma.done [#allocation9], 512
        $region80: #{tpu_custom_call.1} parent=59 // pred_fallthru
          _
        %s449 = sand.u32 %s44, 1
        %s450 = scalar_lea.sflag [#allocation3], %s449
        %s451 = sand.u32 %s44, 1
        %s452 = smul.addr %s451, 8
        %s453 = scalar_lea.vmem [#allocation2], %s452
        %p454 = pneg %p57
        %p455 = pneg %p54
        %s456 = sand.u32 %s36, 1
        %s457 = scalar_lea.sflag [#allocation6], %s456
        %s458 = sand.u32 %s70, 1
        %s459 = smul.addr %s458, 8
        %s460 = scalar_lea.vmem [#allocation5], %s459
        %p461 = pneg %p83
        %p462 = pneg %p80
        %p463 = pneg %p104
        %p464 = pneg %p101
        %p465 = pneg %p125
        %p466 = pneg %p122
        %p467 = pneg %p146
        %p468 = pneg %p143
        %p469 = pneg %p167
        %p470 = pneg %p164
        %p471 = pneg %p188
        %p472 = pneg %p185
        %p473 = pneg %p209
        %p474 = pneg %p206
        %p475 = pneg %p230
        %p476 = pneg %p227
        %p477 = pneg %p251
        %p478 = pneg %p248
        %p479 = pneg %p277
        %p480 = pneg %p274
        %s481 = sand.u32 %s264, 1
        %s482 = scalar_lea.sflag [#allocation4], %s481
        %s483 = sand.u32 %s264, 1
        %s484 = smul.addr %s483, 8
        %s485 = scalar_lea.vmem [#allocation11], %s484
        %p486 = pneg %p303
        %p487 = pneg %p300
        %s488 = sand.u32 %s290, 1
        %s489 = scalar_lea.sflag [#allocation13], %s488
        %s490 = sand.u32 %s290, 1
        %s491 = smul.addr %s490, 32
        %s492 = scalar_lea.vmem [#allocation12], %s491
        %v493 = vld [vmem:[%s423] sm:$0xff]
        %v494 = vld [vmem:[%s432] sm:$0xff]
        %v495 = vld [vmem:[#allocation7] sm:$0xff]
        %v496 = vld [vmem:[#allocation7 + $0x8] sm:$0xff]
        %v497 = vld [vmem:[#allocation7 + $0x10] sm:$0xff]
        %v498 = vld [vmem:[#allocation7 + $0x18] sm:$0xff]
        %v499 = vld [vmem:[%s3] sm:$0x1]
        %v501 = vlaneseq
        %v502 = vshrl.u32 %v501, 7
        %v503 = vsub.s32 0, %v502
        %v504 = vrot.slane %v499, %v503
        %vm506 = vcmask 261120
        %v508 = vsel %vm506, %v493, 0
        %510 = vmatprep.subr.mxu0 0.0
        %511 = vmatpush1.msra.mxu0 0.0
        %512 = vmatprep.subr.mxu0 0.0
        %513 = vmatpush1.msra.mxu0 0.0
        %514 = vmatprep.subr.mxu0 0.0
        %515 = vmatpush1.msra.mxu0 0.0
        %516 = vmatprep.subr.mxu0 0.0
        %517 = vmatpush1.msra.mxu0 0.0
        %518 = vmatprep.subr.mxu0 0.0
        %519 = vmatpush1.msra.mxu0 0.0
        %520 = vmatprep.subr.mxu0 0.0
        %521 = vmatpush1.msra.mxu0 0.0
        %522 = vmatprep.subr.mxu0 0.0
        %523 = vmatpush1.msra.mxu0 0.0
        %524 = vmatprep.subr.mxu0 0.0
        %525 = vmatpush1.msra.mxu0 0.0
        %526 = vmatprep.subr.mxu0 0.0
        %527 = vmatpush1.msra.mxu0 0.0
        %528 = vmatprep.subr.mxu0 0.0
        %529 = vmatpush1.msra.mxu0 0.0
        %530 = vmatprep.subr.mxu0 0.0
        %531 = vmatpush1.msra.mxu0 0.0
        %532 = vmatprep.subr.mxu0 0.0
        %533 = vmatpush1.msra.mxu0 0.0
        %534 = vmatprep.subr.mxu0 0.0
        %535 = vmatpush1.msra.mxu0 %v498
        %536 = vmatprep.subr.mxu0 0.0
        %537 = vmatpush1.msra.mxu0 %v497
        %538 = vmatprep.subr.mxu0 0.0
        %539 = vmatpush1.msra.mxu0 %v496
        %540 = vmatprep.subr.mxu0 0.0
        %541 = vmatpush1.msra.mxu0 %v495
        %542 = vmatprep.subr.mxu0 0.0
        %543 = vmatpush2.msra.mxu0 0.0
        %544 = vmatprep.subr.mxu0 0.0
        %545 = vmatpush2.msra.mxu0 0.0
        %546 = vmatprep.subr.mxu0 0.0
        %547 = vmatpush2.msra.mxu0 0.0
        %548 = vmatprep.subr.mxu0 0.0
        %549 = vmatpush2.msra.mxu0 0.0
        %550 = vmatprep.subr.mxu0 0.0
        %551 = vmatpush2.msra.mxu0 0.0
        %552 = vmatprep.subr.mxu0 0.0
        %553 = vmatpush2.msra.mxu0 0.0
        %554 = vmatprep.subr.mxu0 0.0
        %555 = vmatpush2.msra.mxu0 0.0
        %556 = vmatprep.subr.mxu0 0.0
        %557 = vmatpush2.msra.mxu0 0.0
        %558 = vmatprep.subr.mxu0 0.0
        %559 = vmatpush2.msra.mxu0 0.0
        %560 = vmatprep.subr.mxu0 0.0
        %561 = vmatpush2.msra.mxu0 0.0
        %562 = vmatprep.subr.mxu0 0.0
        %563 = vmatpush2.msra.mxu0 0.0
        %564 = vmatprep.subr.mxu0 0.0
        %565 = vmatpush2.msra.mxu0 0.0
        %566 = vmatprep.subr.mxu0 0.0
        %567 = vmatpush2.msra.mxu0 0.0
        %568 = vmatprep.subr.mxu0 0.0
        %569 = vmatpush2.msra.mxu0 0.0
        %570 = vmatprep.subr.mxu0 0.0
        %571 = vmatpush2.msra.mxu0 0.0
        %572 = vmatprep.subr.mxu0 0.0
        %573 = vmatpush2.msra.mxu0 0.0
        %574 = vmatprep.mubr.f32.mxu0 0.0
        %575 = vmatmul.mubr.f32.gmra.mxu0 %v508
        %v576 = vpop.f32.mrf.mxu0
        %v577 = vadd.f32 %v504, %v576
        %v578 = vpop.f32.mrf.mxu0
        %579 = vdwg.mxu0
        %v580 = vld [vmem:[#allocation8] sm:$0xff]
        %v581 = vld [vmem:[#allocation8 + $0x8] sm:$0xff]
        %v582 = vld [vmem:[#allocation8 + $0x10] sm:$0xff]
        %v583 = vld [vmem:[#allocation8 + $0x18] sm:$0xff]
        %v584 = vld [vmem:[%s5] sm:$0x1]
        %v586 = vlaneseq
        %v587 = vshrl.u32 %v586, 7
        %v588 = vsub.s32 0, %v587
        %v589 = vrot.slane %v584, %v588
        %v592 = vsel %vm506, %v494, 0
        %594 = vmatprep.subr.mxu0 0.0
        %595 = vmatpush1.msra.mxu0 0.0
        %596 = vmatprep.subr.mxu0 0.0
        %597 = vmatpush1.msra.mxu0 0.0
        %598 = vmatprep.subr.mxu0 0.0
        %599 = vmatpush1.msra.mxu0 0.0
        %600 = vmatprep.subr.mxu0 0.0
        %601 = vmatpush1.msra.mxu0 0.0
        %602 = vmatprep.subr.mxu0 0.0
        %603 = vmatpush1.msra.mxu0 0.0
        %604 = vmatprep.subr.mxu0 0.0
        %605 = vmatpush1.msra.mxu0 0.0
        %606 = vmatprep.subr.mxu0 0.0
        %607 = vmatpush1.msra.mxu0 0.0
        %608 = vmatprep.subr.mxu0 0.0
        %609 = vmatpush1.msra.mxu0 0.0
        %610 = vmatprep.subr.mxu0 0.0
        %611 = vmatpush1.msra.mxu0 0.0
        %612 = vmatprep.subr.mxu0 0.0
        %613 = vmatpush1.msra.mxu0 0.0
        %614 = vmatprep.subr.mxu0 0.0
        %615 = vmatpush1.msra.mxu0 0.0
        %616 = vmatprep.subr.mxu0 0.0
        %617 = vmatpush1.msra.mxu0 0.0
        %618 = vmatprep.subr.mxu0 0.0
        %619 = vmatpush1.msra.mxu0 %v583
        %620 = vmatprep.subr.mxu0 0.0
        %621 = vmatpush1.msra.mxu0 %v582
        %622 = vmatprep.subr.mxu0 0.0
        %623 = vmatpush1.msra.mxu0 %v581
        %624 = vmatprep.subr.mxu0 0.0
        %625 = vmatpush1.msra.mxu0 %v580
        %626 = vmatprep.subr.mxu0 0.0
        %627 = vmatpush2.msra.mxu0 0.0
        %628 = vmatprep.subr.mxu0 0.0
        %629 = vmatpush2.msra.mxu0 0.0
        %630 = vmatprep.subr.mxu0 0.0
        %631 = vmatpush2.msra.mxu0 0.0
        %632 = vmatprep.subr.mxu0 0.0
        %633 = vmatpush2.msra.mxu0 0.0
        %634 = vmatprep.subr.mxu0 0.0
        %635 = vmatpush2.msra.mxu0 0.0
        %636 = vmatprep.subr.mxu0 0.0
        %637 = vmatpush2.msra.mxu0 0.0
        %638 = vmatprep.subr.mxu0 0.0
        %639 = vmatpush2.msra.mxu0 0.0
        %640 = vmatprep.subr.mxu0 0.0
        %641 = vmatpush2.msra.mxu0 0.0
        %642 = vmatprep.subr.mxu0 0.0
        %643 = vmatpush2.msra.mxu0 0.0
        %644 = vmatprep.subr.mxu0 0.0
        %645 = vmatpush2.msra.mxu0 0.0
        %646 = vmatprep.subr.mxu0 0.0
        %647 = vmatpush2.msra.mxu0 0.0
        %648 = vmatprep.subr.mxu0 0.0
        %649 = vmatpush2.msra.mxu0 0.0
        %650 = vmatprep.subr.mxu0 0.0
        %651 = vmatpush2.msra.mxu0 0.0
        %652 = vmatprep.subr.mxu0 0.0
        %653 = vmatpush2.msra.mxu0 0.0
        %654 = vmatprep.subr.mxu0 0.0
        %655 = vmatpush2.msra.mxu0 0.0
        %656 = vmatprep.subr.mxu0 0.0
        %657 = vmatpush2.msra.mxu0 0.0
        %658 = vmatprep.mubr.f32.mxu0 0.0
        %659 = vmatmul.mubr.f32.gmra.mxu0 %v592
        %v660 = vpop.f32.mrf.mxu0
        %v661 = vadd.f32 %v589, %v660
        %v662 = vpop.f32.mrf.mxu0
        %663 = vdwg.mxu0
        %665 = vrot.lane.b32.xlu0 %v577, 120
        %v666 = vpop.permute.xlu0 %665
        %668 = vrot.lane.b32.xlu0 %v577, 112
        %v669 = vpop.permute.xlu0 %668
        %671 = vrot.lane.b32.xlu0 %v577, 104
        %v672 = vpop.permute.xlu0 %671
        %v674 = vcombine.low %v577, %v669
        %v675 = vcombine.high %v577, %v669
        %v677 = vunpack.c.l.s4 1983009808
        %v678 = vunpack.c.0.s8 %v677
        %v679 = vlaneseq
        %v680 = vshrl.u32 %v679, 7
        %v681 = vsub.s32 %v678, %v680
        %v682 = vrot.slane %v674, %v681
        %v684 = vunpack.c.l.s4 1983009808
        %v685 = vunpack.c.0.s8 %v684
        %v686 = vlaneseq
        %v687 = vshrl.u32 %v686, 7
        %v688 = vsub.s32 %v685, %v687
        %v689 = vrot.slane %v675, %v688
        %v690 = vcombine.low %v666, %v672
        %v691 = vcombine.high %v666, %v672
        %v693 = vunpack.c.l.s4 1983009808
        %v694 = vunpack.c.0.s8 %v693
        %v695 = vlaneseq
        %v696 = vshrl.u32 %v695, 7
        %v697 = vsub.s32 %v694, %v696
        %v698 = vrot.slane %v690, %v697
        %v700 = vunpack.c.l.s4 1983009808
        %v701 = vunpack.c.0.s8 %v700
        %v702 = vlaneseq
        %v703 = vshrl.u32 %v702, 7
        %v704 = vsub.s32 %v701, %v703
        %v705 = vrot.slane %v691, %v704
        %v706 = vcombine.low %v682, %v698
        %v707 = vcombine.high %v682, %v698
        %v709 = vunpack.c.l.s4 1934713408
        %v710 = vunpack.c.0.s8 %v709
        %v711 = vlaneseq
        %v712 = vshrl.u32 %v711, 7
        %v713 = vsub.s32 %v710, %v712
        %v714 = vrot.slane %v706, %v713
        %v716 = vunpack.c.l.s4 1934713408
        %v717 = vunpack.c.0.s8 %v716
        %v718 = vlaneseq
        %v719 = vshrl.u32 %v718, 7
        %v720 = vsub.s32 %v717, %v719
        %v721 = vrot.slane %v707, %v720
        %v722 = vcombine.low %v689, %v705
        %v723 = vcombine.high %v689, %v705
        %v725 = vunpack.c.l.s4 1934713408
        %v726 = vunpack.c.0.s8 %v725
        %v727 = vlaneseq
        %v728 = vshrl.u32 %v727, 7
        %v729 = vsub.s32 %v726, %v728
        %v730 = vrot.slane %v722, %v729
        %v732 = vunpack.c.l.s4 1934713408
        %v733 = vunpack.c.0.s8 %v732
        %v734 = vlaneseq
        %v735 = vshrl.u32 %v734, 7
        %v736 = vsub.s32 %v733, %v735
        %v737 = vrot.slane %v723, %v736
        %v738 = vcombine.high %v714, 0.0
        %v739 = vcombine.high %v721, 0.0
        %v740 = vcombine.high %v730, 0.0
        %v741 = vcombine.high %v737, 0.0
        %v742 = vcombine.low %v714, %v721
        %v744 = vunpack.c.l.s4 1983009808
        %v745 = vunpack.c.0.s8 %v744
        %v746 = vlaneseq
        %v747 = vshrl.u32 %v746, 7
        %v748 = vsub.s32 %v745, %v747
        %v749 = vrot.slane %v742, %v748
        %v750 = vcombine.low %v738, %v739
        %v752 = vunpack.c.l.s4 1983009808
        %v753 = vunpack.c.0.s8 %v752
        %v754 = vlaneseq
        %v755 = vshrl.u32 %v754, 7
        %v756 = vsub.s32 %v753, %v755
        %v757 = vrot.slane %v750, %v756
        %v758 = vcombine.low %v730, %v737
        %v760 = vunpack.c.l.s4 1983009808
        %v761 = vunpack.c.0.s8 %v760
        %v762 = vlaneseq
        %v763 = vshrl.u32 %v762, 7
        %v764 = vsub.s32 %v761, %v763
        %v765 = vrot.slane %v758, %v764
        %v766 = vcombine.low %v740, %v741
        %v768 = vunpack.c.l.s4 1983009808
        %v769 = vunpack.c.0.s8 %v768
        %v770 = vlaneseq
        %v771 = vshrl.u32 %v770, 7
        %v772 = vsub.s32 %v769, %v771
        %v773 = vrot.slane %v766, %v772
        %v774 = vcombine.low %v749, %v757
        %v775 = vcombine.high %v749, %v757
        %v777 = vunpack.c.l.s4 1934713408
        %v778 = vunpack.c.0.s8 %v777
        %v779 = vlaneseq
        %v780 = vshrl.u32 %v779, 7
        %v781 = vsub.s32 %v778, %v780
        %v782 = vrot.slane %v774, %v781
        %v784 = vunpack.c.l.s4 1934713408
        %v785 = vunpack.c.0.s8 %v784
        %v786 = vlaneseq
        %v787 = vshrl.u32 %v786, 7
        %v788 = vsub.s32 %v785, %v787
        %v789 = vrot.slane %v775, %v788
        %v790 = vcombine.low %v765, %v773
        %v791 = vcombine.high %v765, %v773
        %v793 = vunpack.c.l.s4 1934713408
        %v794 = vunpack.c.0.s8 %v793
        %v795 = vlaneseq
        %v796 = vshrl.u32 %v795, 7
        %v797 = vsub.s32 %v794, %v796
        %v798 = vrot.slane %v790, %v797
        %v800 = vunpack.c.l.s4 1934713408
        %v801 = vunpack.c.0.s8 %v800
        %v802 = vlaneseq
        %v803 = vshrl.u32 %v802, 7
        %v804 = vsub.s32 %v801, %v803
        %v805 = vrot.slane %v791, %v804
        %v806 = vcombine.low %v782, %v798
        %v807 = vcombine.high %v782, %v798
        %v808 = vcombine.low %v789, %v805
        %v809 = vcombine.high %v789, %v805
        %811 = vrot.lane.b32.xlu0 %v661, 120
        %v812 = vpop.permute.xlu0 %811
        %814 = vrot.lane.b32.xlu0 %v661, 112
        %v815 = vpop.permute.xlu0 %814
        %817 = vrot.lane.b32.xlu0 %v661, 104
        %v818 = vpop.permute.xlu0 %817
        %v820 = vcombine.low %v661, %v815
        %v821 = vcombine.high %v661, %v815
        %v823 = vunpack.c.l.s4 1983009808
        %v824 = vunpack.c.0.s8 %v823
        %v825 = vlaneseq
        %v826 = vshrl.u32 %v825, 7
        %v827 = vsub.s32 %v824, %v826
        %v828 = vrot.slane %v820, %v827
        %v830 = vunpack.c.l.s4 1983009808
        %v831 = vunpack.c.0.s8 %v830
        %v832 = vlaneseq
        %v833 = vshrl.u32 %v832, 7
        %v834 = vsub.s32 %v831, %v833
        %v835 = vrot.slane %v821, %v834
        %v836 = vcombine.low %v812, %v818
        %v837 = vcombine.high %v812, %v818
        %v839 = vunpack.c.l.s4 1983009808
        %v840 = vunpack.c.0.s8 %v839
        %v841 = vlaneseq
        %v842 = vshrl.u32 %v841, 7
        %v843 = vsub.s32 %v840, %v842
        %v844 = vrot.slane %v836, %v843
        %v846 = vunpack.c.l.s4 1983009808
        %v847 = vunpack.c.0.s8 %v846
        %v848 = vlaneseq
        %v849 = vshrl.u32 %v848, 7
        %v850 = vsub.s32 %v847, %v849
        %v851 = vrot.slane %v837, %v850
        %v852 = vcombine.low %v828, %v844
        %v853 = vcombine.high %v828, %v844
        %v855 = vunpack.c.l.s4 1934713408
        %v856 = vunpack.c.0.s8 %v855
        %v857 = vlaneseq
        %v858 = vshrl.u32 %v857, 7
        %v859 = vsub.s32 %v856, %v858
        %v860 = vrot.slane %v852, %v859
        %v862 = vunpack.c.l.s4 1934713408
        %v863 = vunpack.c.0.s8 %v862
        %v864 = vlaneseq
        %v865 = vshrl.u32 %v864, 7
        %v866 = vsub.s32 %v863, %v865
        %v867 = vrot.slane %v853, %v866
        %v868 = vcombine.low %v835, %v851
        %v869 = vcombine.high %v835, %v851
        %v871 = vunpack.c.l.s4 1934713408
        %v872 = vunpack.c.0.s8 %v871
        %v873 = vlaneseq
        %v874 = vshrl.u32 %v873, 7
        %v875 = vsub.s32 %v872, %v874
        %v876 = vrot.slane %v868, %v875
        %v878 = vunpack.c.l.s4 1934713408
        %v879 = vunpack.c.0.s8 %v878
        %v880 = vlaneseq
        %v881 = vshrl.u32 %v880, 7
        %v882 = vsub.s32 %v879, %v881
        %v883 = vrot.slane %v869, %v882
        %v884 = vcombine.high %v860, 0.0
        %v885 = vcombine.high %v867, 0.0
        %v886 = vcombine.high %v876, 0.0
        %v887 = vcombine.high %v883, 0.0
        %v888 = vcombine.low %v860, %v867
        %v890 = vunpack.c.l.s4 1983009808
        %v891 = vunpack.c.0.s8 %v890
        %v892 = vlaneseq
        %v893 = vshrl.u32 %v892, 7
        %v894 = vsub.s32 %v891, %v893
        %v895 = vrot.slane %v888, %v894
        %v896 = vcombine.low %v884, %v885
        %v898 = vunpack.c.l.s4 1983009808
        %v899 = vunpack.c.0.s8 %v898
        %v900 = vlaneseq
        %v901 = vshrl.u32 %v900, 7
        %v902 = vsub.s32 %v899, %v901
        %v903 = vrot.slane %v896, %v902
        %v904 = vcombine.low %v876, %v883
        %v906 = vunpack.c.l.s4 1983009808
        %v907 = vunpack.c.0.s8 %v906
        %v908 = vlaneseq
        %v909 = vshrl.u32 %v908, 7
        %v910 = vsub.s32 %v907, %v909
        %v911 = vrot.slane %v904, %v910
        %v912 = vcombine.low %v886, %v887
        %v914 = vunpack.c.l.s4 1983009808
        %v915 = vunpack.c.0.s8 %v914
        %v916 = vlaneseq
        %v917 = vshrl.u32 %v916, 7
        %v918 = vsub.s32 %v915, %v917
        %v919 = vrot.slane %v912, %v918
        %v920 = vcombine.low %v895, %v903
        %v921 = vcombine.high %v895, %v903
        %v923 = vunpack.c.l.s4 1934713408
        %v924 = vunpack.c.0.s8 %v923
        %v925 = vlaneseq
        %v926 = vshrl.u32 %v925, 7
        %v927 = vsub.s32 %v924, %v926
        %v928 = vrot.slane %v920, %v927
        %v930 = vunpack.c.l.s4 1934713408
        %v931 = vunpack.c.0.s8 %v930
        %v932 = vlaneseq
        %v933 = vshrl.u32 %v932, 7
        %v934 = vsub.s32 %v931, %v933
        %v935 = vrot.slane %v921, %v934
        %v936 = vcombine.low %v911, %v919
        %v937 = vcombine.high %v911, %v919
        %v939 = vunpack.c.l.s4 1934713408
        %v940 = vunpack.c.0.s8 %v939
        %v941 = vlaneseq
        %v942 = vshrl.u32 %v941, 7
        %v943 = vsub.s32 %v940, %v942
        %v944 = vrot.slane %v936, %v943
        %v946 = vunpack.c.l.s4 1934713408
        %v947 = vunpack.c.0.s8 %v946
        %v948 = vlaneseq
        %v949 = vshrl.u32 %v948, 7
        %v950 = vsub.s32 %v947, %v949
        %v951 = vrot.slane %v937, %v950
        %v952 = vcombine.low %v928, %v944
        %v953 = vcombine.high %v928, %v944
        %v954 = vcombine.low %v935, %v951
        %v955 = vcombine.high %v935, %v951
        %956 = vrot.lane.b32.xlu0 %v661, 96
        %v957 = vpop.permute.xlu0 %956
        %958 = vrot.lane.b32.xlu0 %v812, 96
        %v959 = vpop.permute.xlu0 %958
        %960 = vrot.lane.b32.xlu0 %v815, 96
        %v961 = vpop.permute.xlu0 %960
        %962 = vrot.lane.b32.xlu0 %v818, 96
        %v963 = vpop.permute.xlu0 %962
        %v968 = vcombine.low %v957, %v961
        %v969 = vcombine.high %v957, %v961
        %v971 = vunpack.c.l.s4 1983009808
        %v972 = vunpack.c.0.s8 %v971
        %v973 = vlaneseq
        %v974 = vshrl.u32 %v973, 7
        %v975 = vsub.s32 %v972, %v974
        %v976 = vrot.slane %v968, %v975
        %v978 = vunpack.c.l.s4 1983009808
        %v979 = vunpack.c.0.s8 %v978
        %v980 = vlaneseq
        %v981 = vshrl.u32 %v980, 7
        %v982 = vsub.s32 %v979, %v981
        %v983 = vrot.slane %v969, %v982
        %v984 = vcombine.low %v959, %v963
        %v985 = vcombine.high %v959, %v963
        %v987 = vunpack.c.l.s4 1983009808
        %v988 = vunpack.c.0.s8 %v987
        %v989 = vlaneseq
        %v990 = vshrl.u32 %v989, 7
        %v991 = vsub.s32 %v988, %v990
        %v992 = vrot.slane %v984, %v991
        %v994 = vunpack.c.l.s4 1983009808
        %v995 = vunpack.c.0.s8 %v994
        %v996 = vlaneseq
        %v997 = vshrl.u32 %v996, 7
        %v998 = vsub.s32 %v995, %v997
        %v999 = vrot.slane %v985, %v998
        %v1000 = vcombine.low %v976, %v992
        %v1001 = vcombine.high %v976, %v992
        %v1003 = vunpack.c.l.s4 1934713408
        %v1004 = vunpack.c.0.s8 %v1003
        %v1005 = vlaneseq
        %v1006 = vshrl.u32 %v1005, 7
        %v1007 = vsub.s32 %v1004, %v1006
        %v1008 = vrot.slane %v1000, %v1007
        %v1010 = vunpack.c.l.s4 1934713408
        %v1011 = vunpack.c.0.s8 %v1010
        %v1012 = vlaneseq
        %v1013 = vshrl.u32 %v1012, 7
        %v1014 = vsub.s32 %v1011, %v1013
        %v1015 = vrot.slane %v1001, %v1014
        %v1016 = vcombine.low %v983, %v999
        %v1017 = vcombine.high %v983, %v999
        %v1019 = vunpack.c.l.s4 1934713408
        %v1020 = vunpack.c.0.s8 %v1019
        %v1021 = vlaneseq
        %v1022 = vshrl.u32 %v1021, 7
        %v1023 = vsub.s32 %v1020, %v1022
        %v1024 = vrot.slane %v1016, %v1023
        %v1026 = vunpack.c.l.s4 1934713408
        %v1027 = vunpack.c.0.s8 %v1026
        %v1028 = vlaneseq
        %v1029 = vshrl.u32 %v1028, 7
        %v1030 = vsub.s32 %v1027, %v1029
        %v1031 = vrot.slane %v1017, %v1030
        %v1032 = vcombine.high %v1008, 0.0
        %v1033 = vcombine.high %v1015, 0.0
        %v1034 = vcombine.high %v1024, 0.0
        %v1035 = vcombine.high %v1031, 0.0
        %v1036 = vcombine.low %v1008, %v1015
        %v1038 = vunpack.c.l.s4 1983009808
        %v1039 = vunpack.c.0.s8 %v1038
        %v1040 = vlaneseq
        %v1041 = vshrl.u32 %v1040, 7
        %v1042 = vsub.s32 %v1039, %v1041
        %v1043 = vrot.slane %v1036, %v1042
        %v1044 = vcombine.low %v1032, %v1033
        %v1046 = vunpack.c.l.s4 1983009808
        %v1047 = vunpack.c.0.s8 %v1046
        %v1048 = vlaneseq
        %v1049 = vshrl.u32 %v1048, 7
        %v1050 = vsub.s32 %v1047, %v1049
        %v1051 = vrot.slane %v1044, %v1050
        %v1052 = vcombine.low %v1024, %v1031
        %v1054 = vunpack.c.l.s4 1983009808
        %v1055 = vunpack.c.0.s8 %v1054
        %v1056 = vlaneseq
        %v1057 = vshrl.u32 %v1056, 7
        %v1058 = vsub.s32 %v1055, %v1057
        %v1059 = vrot.slane %v1052, %v1058
        %v1060 = vcombine.low %v1034, %v1035
        %v1062 = vunpack.c.l.s4 1983009808
        %v1063 = vunpack.c.0.s8 %v1062
        %v1064 = vlaneseq
        %v1065 = vshrl.u32 %v1064, 7
        %v1066 = vsub.s32 %v1063, %v1065
        %v1067 = vrot.slane %v1060, %v1066
        %v1068 = vcombine.low %v1043, %v1051
        %v1069 = vcombine.high %v1043, %v1051
        %v1071 = vunpack.c.l.s4 1934713408
        %v1072 = vunpack.c.0.s8 %v1071
        %v1073 = vlaneseq
        %v1074 = vshrl.u32 %v1073, 7
        %v1075 = vsub.s32 %v1072, %v1074
        %v1076 = vrot.slane %v1068, %v1075
        %v1078 = vunpack.c.l.s4 1934713408
        %v1079 = vunpack.c.0.s8 %v1078
        %v1080 = vlaneseq
        %v1081 = vshrl.u32 %v1080, 7
        %v1082 = vsub.s32 %v1079, %v1081
        %v1083 = vrot.slane %v1069, %v1082
        %v1084 = vcombine.low %v1059, %v1067
        %v1085 = vcombine.high %v1059, %v1067
        %v1087 = vunpack.c.l.s4 1934713408
        %v1088 = vunpack.c.0.s8 %v1087
        %v1089 = vlaneseq
        %v1090 = vshrl.u32 %v1089, 7
        %v1091 = vsub.s32 %v1088, %v1090
        %v1092 = vrot.slane %v1084, %v1091
        %v1094 = vunpack.c.l.s4 1934713408
        %v1095 = vunpack.c.0.s8 %v1094
        %v1096 = vlaneseq
        %v1097 = vshrl.u32 %v1096, 7
        %v1098 = vsub.s32 %v1095, %v1097
        %v1099 = vrot.slane %v1085, %v1098
        %v1100 = vcombine.low %v1076, %v1092
        %v1101 = vcombine.high %v1076, %v1092
        %v1102 = vcombine.low %v1083, %v1099
        %v1103 = vcombine.high %v1083, %v1099
        %vm1104 = vcmask 64512
        %v1106 = vsel %vm1104, %v806, 0
        %v1109 = vsel %vm1104, %v952, 0
        %1111 = vmatprep.subr.mxu0 0.0
        %1112 = vmatpush1.xpose.msra.mxu0 0.0
        %1113 = vmatprep.subr.mxu0 0.0
        %1114 = vmatpush1.xpose.msra.mxu0 0.0
        %1115 = vmatprep.subr.mxu0 0.0
        %1116 = vmatpush1.xpose.msra.mxu0 0.0
        %1117 = vmatprep.subr.mxu0 0.0
        %1118 = vmatpush1.xpose.msra.mxu0 0.0
        %1119 = vmatprep.subr.mxu0 0.0
        %1120 = vmatpush1.xpose.msra.mxu0 0.0
        %1121 = vmatprep.subr.mxu0 0.0
        %1122 = vmatpush1.xpose.msra.mxu0 0.0
        %1123 = vmatprep.subr.mxu0 0.0
        %1124 = vmatpush1.xpose.msra.mxu0 0.0
        %1125 = vmatprep.subr.mxu0 0.0
        %1126 = vmatpush1.xpose.msra.mxu0 0.0
        %1127 = vmatprep.subr.mxu0 0.0
        %1128 = vmatpush1.xpose.msra.mxu0 0.0
        %1129 = vmatprep.subr.mxu0 0.0
        %1130 = vmatpush1.xpose.msra.mxu0 0.0
        %1131 = vmatprep.subr.mxu0 0.0
        %1132 = vmatpush1.xpose.msra.mxu0 0.0
        %1133 = vmatprep.subr.mxu0 0.0
        %1134 = vmatpush1.xpose.msra.mxu0 0.0
        %1135 = vmatprep.subr.mxu0 0.0
        %1136 = vmatpush1.xpose.msra.mxu0 0.0
        %1137 = vmatprep.subr.mxu0 0.0
        %1138 = vmatpush1.xpose.msra.mxu0 0.0
        %1139 = vmatprep.subr.mxu0 0.0
        %1140 = vmatpush1.xpose.msra.mxu0 0.0
        %1141 = vmatprep.subr.mxu0 0.0
        %1142 = vmatpush1.xpose.msra.mxu0 %v1109
        %1143 = vmatprep.subr.mxu0 0.0
        %1144 = vmatpush2.xpose.msra.mxu0 0.0
        %1145 = vmatprep.subr.mxu0 0.0
        %1146 = vmatpush2.xpose.msra.mxu0 0.0
        %1147 = vmatprep.subr.mxu0 0.0
        %1148 = vmatpush2.xpose.msra.mxu0 0.0
        %1149 = vmatprep.subr.mxu0 0.0
        %1150 = vmatpush2.xpose.msra.mxu0 0.0
        %1151 = vmatprep.subr.mxu0 0.0
        %1152 = vmatpush2.xpose.msra.mxu0 0.0
        %1153 = vmatprep.subr.mxu0 0.0
        %1154 = vmatpush2.xpose.msra.mxu0 0.0
        %1155 = vmatprep.subr.mxu0 0.0
        %1156 = vmatpush2.xpose.msra.mxu0 0.0
        %1157 = vmatprep.subr.mxu0 0.0
        %1158 = vmatpush2.xpose.msra.mxu0 0.0
        %1159 = vmatprep.subr.mxu0 0.0
        %1160 = vmatpush2.xpose.msra.mxu0 0.0
        %1161 = vmatprep.subr.mxu0 0.0
        %1162 = vmatpush2.xpose.msra.mxu0 0.0
        %1163 = vmatprep.subr.mxu0 0.0
        %1164 = vmatpush2.xpose.msra.mxu0 0.0
        %1165 = vmatprep.subr.mxu0 0.0
        %1166 = vmatpush2.xpose.msra.mxu0 0.0
        %1167 = vmatprep.subr.mxu0 0.0
        %1168 = vmatpush2.xpose.msra.mxu0 0.0
        %1169 = vmatprep.subr.mxu0 0.0
        %1170 = vmatpush2.xpose.msra.mxu0 0.0
        %1171 = vmatprep.subr.mxu0 0.0
        %1172 = vmatpush2.xpose.msra.mxu0 0.0
        %1173 = vmatprep.subr.mxu0 0.0
        %1174 = vmatpush2.xpose.msra.mxu0 0.0
        %1175 = vmatprep.mubr.f32.mxu0 0.0
        %1176 = vmatmul.mubr.f32.gmra.mxu0 %v1106
        %v1177 = vpop.f32.mrf.mxu0
        %v1178 = vadd.f32 0.0, %v1177
        %v1179 = vpop.f32.mrf.mxu0
        %1180 = vdwg.mxu0
        %v1182 = vsel %vm1104, %v807, 0
        %v1185 = vsel %vm1104, %v953, 0
        %1187 = vmatprep.subr.mxu0 0.0
        %1188 = vmatpush1.xpose.msra.mxu0 0.0
        %1189 = vmatprep.subr.mxu0 0.0
        %1190 = vmatpush1.xpose.msra.mxu0 0.0
        %1191 = vmatprep.subr.mxu0 0.0
        %1192 = vmatpush1.xpose.msra.mxu0 0.0
        %1193 = vmatprep.subr.mxu0 0.0
        %1194 = vmatpush1.xpose.msra.mxu0 0.0
        %1195 = vmatprep.subr.mxu0 0.0
        %1196 = vmatpush1.xpose.msra.mxu0 0.0
        %1197 = vmatprep.subr.mxu0 0.0
        %1198 = vmatpush1.xpose.msra.mxu0 0.0
        %1199 = vmatprep.subr.mxu0 0.0
        %1200 = vmatpush1.xpose.msra.mxu0 0.0
        %1201 = vmatprep.subr.mxu0 0.0
        %1202 = vmatpush1.xpose.msra.mxu0 0.0
        %1203 = vmatprep.subr.mxu0 0.0
        %1204 = vmatpush1.xpose.msra.mxu0 0.0
        %1205 = vmatprep.subr.mxu0 0.0
        %1206 = vmatpush1.xpose.msra.mxu0 0.0
        %1207 = vmatprep.subr.mxu0 0.0
        %1208 = vmatpush1.xpose.msra.mxu0 0.0
        %1209 = vmatprep.subr.mxu0 0.0
        %1210 = vmatpush1.xpose.msra.mxu0 0.0
        %1211 = vmatprep.subr.mxu0 0.0
        %1212 = vmatpush1.xpose.msra.mxu0 0.0
        %1213 = vmatprep.subr.mxu0 0.0
        %1214 = vmatpush1.xpose.msra.mxu0 0.0
        %1215 = vmatprep.subr.mxu0 0.0
        %1216 = vmatpush1.xpose.msra.mxu0 0.0
        %1217 = vmatprep.subr.mxu0 0.0
        %1218 = vmatpush1.xpose.msra.mxu0 %v1185
        %1219 = vmatprep.subr.mxu0 0.0
        %1220 = vmatpush2.xpose.msra.mxu0 0.0
        %1221 = vmatprep.subr.mxu0 0.0
        %1222 = vmatpush2.xpose.msra.mxu0 0.0
        %1223 = vmatprep.subr.mxu0 0.0
        %1224 = vmatpush2.xpose.msra.mxu0 0.0
        %1225 = vmatprep.subr.mxu0 0.0
        %1226 = vmatpush2.xpose.msra.mxu0 0.0
        %1227 = vmatprep.subr.mxu0 0.0
        %1228 = vmatpush2.xpose.msra.mxu0 0.0
        %1229 = vmatprep.subr.mxu0 0.0
        %1230 = vmatpush2.xpose.msra.mxu0 0.0
        %1231 = vmatprep.subr.mxu0 0.0
        %1232 = vmatpush2.xpose.msra.mxu0 0.0
        %1233 = vmatprep.subr.mxu0 0.0
        %1234 = vmatpush2.xpose.msra.mxu0 0.0
        %1235 = vmatprep.subr.mxu0 0.0
        %1236 = vmatpush2.xpose.msra.mxu0 0.0
        %1237 = vmatprep.subr.mxu0 0.0
        %1238 = vmatpush2.xpose.msra.mxu0 0.0
        %1239 = vmatprep.subr.mxu0 0.0
        %1240 = vmatpush2.xpose.msra.mxu0 0.0
        %1241 = vmatprep.subr.mxu0 0.0
        %1242 = vmatpush2.xpose.msra.mxu0 0.0
        %1243 = vmatprep.subr.mxu0 0.0
        %1244 = vmatpush2.xpose.msra.mxu0 0.0
        %1245 = vmatprep.subr.mxu0 0.0
        %1246 = vmatpush2.xpose.msra.mxu0 0.0
        %1247 = vmatprep.subr.mxu0 0.0
        %1248 = vmatpush2.xpose.msra.mxu0 0.0
        %1249 = vmatprep.subr.mxu0 0.0
        %1250 = vmatpush2.xpose.msra.mxu0 0.0
        %1251 = vmatprep.mubr.f32.mxu0 0.0
        %1252 = vmatmul.mubr.f32.gmra.mxu0 %v1182
        %v1253 = vpop.f32.mrf.mxu0
        %v1254 = vadd.f32 0.0, %v1253
        %v1255 = vpop.f32.mrf.mxu0
        %1256 = vdwg.mxu0
        %v1258 = vsel %vm1104, %v808, 0
        %v1261 = vsel %vm1104, %v954, 0
        %1263 = vmatprep.subr.mxu0 0.0
        %1264 = vmatpush1.xpose.msra.mxu0 0.0
        %1265 = vmatprep.subr.mxu0 0.0
        %1266 = vmatpush1.xpose.msra.mxu0 0.0
        %1267 = vmatprep.subr.mxu0 0.0
        %1268 = vmatpush1.xpose.msra.mxu0 0.0
        %1269 = vmatprep.subr.mxu0 0.0
        %1270 = vmatpush1.xpose.msra.mxu0 0.0
        %1271 = vmatprep.subr.mxu0 0.0
        %1272 = vmatpush1.xpose.msra.mxu0 0.0
        %1273 = vmatprep.subr.mxu0 0.0
        %1274 = vmatpush1.xpose.msra.mxu0 0.0
        %1275 = vmatprep.subr.mxu0 0.0
        %1276 = vmatpush1.xpose.msra.mxu0 0.0
        %1277 = vmatprep.subr.mxu0 0.0
        %1278 = vmatpush1.xpose.msra.mxu0 0.0
        %1279 = vmatprep.subr.mxu0 0.0
        %1280 = vmatpush1.xpose.msra.mxu0 0.0
        %1281 = vmatprep.subr.mxu0 0.0
        %1282 = vmatpush1.xpose.msra.mxu0 0.0
        %1283 = vmatprep.subr.mxu0 0.0
        %1284 = vmatpush1.xpose.msra.mxu0 0.0
        %1285 = vmatprep.subr.mxu0 0.0
        %1286 = vmatpush1.xpose.msra.mxu0 0.0
        %1287 = vmatprep.subr.mxu0 0.0
        %1288 = vmatpush1.xpose.msra.mxu0 0.0
        %1289 = vmatprep.subr.mxu0 0.0
        %1290 = vmatpush1.xpose.msra.mxu0 0.0
        %1291 = vmatprep.subr.mxu0 0.0
        %1292 = vmatpush1.xpose.msra.mxu0 0.0
        %1293 = vmatprep.subr.mxu0 0.0
        %1294 = vmatpush1.xpose.msra.mxu0 %v1261
        %1295 = vmatprep.subr.mxu0 0.0
        %1296 = vmatpush2.xpose.msra.mxu0 0.0
        %1297 = vmatprep.subr.mxu0 0.0
        %1298 = vmatpush2.xpose.msra.mxu0 0.0
        %1299 = vmatprep.subr.mxu0 0.0
        %1300 = vmatpush2.xpose.msra.mxu0 0.0
        %1301 = vmatprep.subr.mxu0 0.0
        %1302 = vmatpush2.xpose.msra.mxu0 0.0
        %1303 = vmatprep.subr.mxu0 0.0
        %1304 = vmatpush2.xpose.msra.mxu0 0.0
        %1305 = vmatprep.subr.mxu0 0.0
        %1306 = vmatpush2.xpose.msra.mxu0 0.0
        %1307 = vmatprep.subr.mxu0 0.0
        %1308 = vmatpush2.xpose.msra.mxu0 0.0
        %1309 = vmatprep.subr.mxu0 0.0
        %1310 = vmatpush2.xpose.msra.mxu0 0.0
        %1311 = vmatprep.subr.mxu0 0.0
        %1312 = vmatpush2.xpose.msra.mxu0 0.0
        %1313 = vmatprep.subr.mxu0 0.0
        %1314 = vmatpush2.xpose.msra.mxu0 0.0
        %1315 = vmatprep.subr.mxu0 0.0
        %1316 = vmatpush2.xpose.msra.mxu0 0.0
        %1317 = vmatprep.subr.mxu0 0.0
        %1318 = vmatpush2.xpose.msra.mxu0 0.0
        %1319 = vmatprep.subr.mxu0 0.0
        %1320 = vmatpush2.xpose.msra.mxu0 0.0
        %1321 = vmatprep.subr.mxu0 0.0
        %1322 = vmatpush2.xpose.msra.mxu0 0.0
        %1323 = vmatprep.subr.mxu0 0.0
        %1324 = vmatpush2.xpose.msra.mxu0 0.0
        %1325 = vmatprep.subr.mxu0 0.0
        %1326 = vmatpush2.xpose.msra.mxu0 0.0
        %1327 = vmatprep.mubr.f32.mxu0 0.0
        %1328 = vmatmul.mubr.f32.gmra.mxu0 %v1258
        %v1329 = vpop.f32.mrf.mxu0
        %v1330 = vadd.f32 0.0, %v1329
        %v1331 = vpop.f32.mrf.mxu0
        %1332 = vdwg.mxu0
        %v1334 = vsel %vm1104, %v809, 0
        %v1337 = vsel %vm1104, %v955, 0
        %1339 = vmatprep.subr.mxu0 0.0
        %1340 = vmatpush1.xpose.msra.mxu0 0.0
        %1341 = vmatprep.subr.mxu0 0.0
        %1342 = vmatpush1.xpose.msra.mxu0 0.0
        %1343 = vmatprep.subr.mxu0 0.0
        %1344 = vmatpush1.xpose.msra.mxu0 0.0
        %1345 = vmatprep.subr.mxu0 0.0
        %1346 = vmatpush1.xpose.msra.mxu0 0.0
        %1347 = vmatprep.subr.mxu0 0.0
        %1348 = vmatpush1.xpose.msra.mxu0 0.0
        %1349 = vmatprep.subr.mxu0 0.0
        %1350 = vmatpush1.xpose.msra.mxu0 0.0
        %1351 = vmatprep.subr.mxu0 0.0
        %1352 = vmatpush1.xpose.msra.mxu0 0.0
        %1353 = vmatprep.subr.mxu0 0.0
        %1354 = vmatpush1.xpose.msra.mxu0 0.0
        %1355 = vmatprep.subr.mxu0 0.0
        %1356 = vmatpush1.xpose.msra.mxu0 0.0
        %1357 = vmatprep.subr.mxu0 0.0
        %1358 = vmatpush1.xpose.msra.mxu0 0.0
        %1359 = vmatprep.subr.mxu0 0.0
        %1360 = vmatpush1.xpose.msra.mxu0 0.0
        %1361 = vmatprep.subr.mxu0 0.0
        %1362 = vmatpush1.xpose.msra.mxu0 0.0
        %1363 = vmatprep.subr.mxu0 0.0
        %1364 = vmatpush1.xpose.msra.mxu0 0.0
        %1365 = vmatprep.subr.mxu0 0.0
        %1366 = vmatpush1.xpose.msra.mxu0 0.0
        %1367 = vmatprep.subr.mxu0 0.0
        %1368 = vmatpush1.xpose.msra.mxu0 0.0
        %1369 = vmatprep.subr.mxu0 0.0
        %1370 = vmatpush1.xpose.msra.mxu0 %v1337
        %1371 = vmatprep.subr.mxu0 0.0
        %1372 = vmatpush2.xpose.msra.mxu0 0.0
        %1373 = vmatprep.subr.mxu0 0.0
        %1374 = vmatpush2.xpose.msra.mxu0 0.0
        %1375 = vmatprep.subr.mxu0 0.0
        %1376 = vmatpush2.xpose.msra.mxu0 0.0
        %1377 = vmatprep.subr.mxu0 0.0
        %1378 = vmatpush2.xpose.msra.mxu0 0.0
        %1379 = vmatprep.subr.mxu0 0.0
        %1380 = vmatpush2.xpose.msra.mxu0 0.0
        %1381 = vmatprep.subr.mxu0 0.0
        %1382 = vmatpush2.xpose.msra.mxu0 0.0
        %1383 = vmatprep.subr.mxu0 0.0
        %1384 = vmatpush2.xpose.msra.mxu0 0.0
        %1385 = vmatprep.subr.mxu0 0.0
        %1386 = vmatpush2.xpose.msra.mxu0 0.0
        %1387 = vmatprep.subr.mxu0 0.0
        %1388 = vmatpush2.xpose.msra.mxu0 0.0
        %1389 = vmatprep.subr.mxu0 0.0
        %1390 = vmatpush2.xpose.msra.mxu0 0.0
        %1391 = vmatprep.subr.mxu0 0.0
        %1392 = vmatpush2.xpose.msra.mxu0 0.0
        %1393 = vmatprep.subr.mxu0 0.0
        %1394 = vmatpush2.xpose.msra.mxu0 0.0
        %1395 = vmatprep.subr.mxu0 0.0
        %1396 = vmatpush2.xpose.msra.mxu0 0.0
        %1397 = vmatprep.subr.mxu0 0.0
        %1398 = vmatpush2.xpose.msra.mxu0 0.0
        %1399 = vmatprep.subr.mxu0 0.0
        %1400 = vmatpush2.xpose.msra.mxu0 0.0
        %1401 = vmatprep.subr.mxu0 0.0
        %1402 = vmatpush2.xpose.msra.mxu0 0.0
        %1403 = vmatprep.mubr.f32.mxu0 0.0
        %1404 = vmatmul.mubr.f32.gmra.mxu0 %v1334
        %v1405 = vpop.f32.mrf.mxu0
        %v1406 = vadd.f32 0.0, %v1405
        %v1407 = vpop.f32.mrf.mxu0
        %1408 = vdwg.mxu0
        %v1409 = vmul.f32 %v1178, 0.35355338
        %v1410 = vmul.f32 %v1254, 0.35355338
        %v1411 = vmul.f32 %v1330, 0.35355338
        %v1412 = vmul.f32 %v1406, 0.35355338
        %v1413 = vsel %vm1104, %v1409, -inf
        %1414 = vmax.xlane.f32.xlu0 %v1413
        %v1415 = vpop.xlane.xlu0 %1414
        %v1416 = vsel %vm1104, %v1410, -inf
        %1417 = vmax.xlane.f32.xlu0 %v1416
        %v1418 = vpop.xlane.xlu0 %1417
        %v1419 = vsel %vm1104, %v1411, -inf
        %1420 = vmax.xlane.f32.xlu0 %v1419
        %v1421 = vpop.xlane.xlu0 %1420
        %v1422 = vsel %vm1104, %v1412, -inf
        %1423 = vmax.xlane.f32.xlu0 %v1422
        %v1424 = vpop.xlane.xlu0 %1423
        %v1425 = vsub.f32 %v1409, %v1415
        %v1426 = vsub.f32 %v1410, %v1418
        %v1427 = vsub.f32 %v1411, %v1421
        %v1428 = vsub.f32 %v1412, %v1424
        %v1429 = vmul.f32 %v1425, 1.442695
        %v1430 = vpow.pop %v1429
        %v1431 = vmul.f32 %v1426, 1.442695
        %v1432 = vpow.pop %v1431
        %v1433 = vmul.f32 %v1427, 1.442695
        %v1434 = vpow.pop %v1433
        %v1435 = vmul.f32 %v1428, 1.442695
        %v1436 = vpow.pop %v1435
        %v1437 = vsel %vm1104, %v1430, 0.0
        %1438 = vadd.xlane.f32.xlu0 %v1437
        %v1439 = vpop.xlane.xlu0 %1438
        %v1440 = vsel %vm1104, %v1432, 0.0
        %1441 = vadd.xlane.f32.xlu0 %v1440
        %v1442 = vpop.xlane.xlu0 %1441
        %v1443 = vsel %vm1104, %v1434, 0.0
        %1444 = vadd.xlane.f32.xlu0 %v1443
        %v1445 = vpop.xlane.xlu0 %1444
        %v1446 = vsel %vm1104, %v1436, 0.0
        %1447 = vadd.xlane.f32.xlu0 %v1446
        %v1448 = vpop.xlane.xlu0 %1447
        %v1449 = vrcp.pop %v1439
        %v1450 = vrcp.pop %v1442
        %v1451 = vrcp.pop %v1445
        %v1452 = vrcp.pop %v1448
        %v1453 = vmul.f32 %v1430, %v1449
        %v1454 = vmul.f32 %v1432, %v1450
        %v1455 = vmul.f32 %v1434, %v1451
        %v1456 = vmul.f32 %v1436, %v1452
        %1457 = vst.msk [vmem:[%s492] sm:$0xff] %vm1104, %v1453
        %1458 = vst.msk [vmem:[%s492 + $0x8] sm:$0xff] %vm1104, %v1454
        %1459 = vst.msk [vmem:[%s492 + $0x10] sm:$0xff] %vm1104, %v1455
        %1460 = vst.msk [vmem:[%s492 + $0x18] sm:$0xff] %vm1104, %v1456
        %v1462 = vsel %vm1104, %v1453, 0
        %1464 = vmatprep.subr.mxu0 0.0
        %1465 = vmatpush1.msra.mxu0 0.0
        %1466 = vmatprep.subr.mxu0 0.0
        %1467 = vmatpush1.msra.mxu0 0.0
        %1468 = vmatprep.subr.mxu0 0.0
        %1469 = vmatpush1.msra.mxu0 0.0
        %1470 = vmatprep.subr.mxu0 0.0
        %1471 = vmatpush1.msra.mxu0 0.0
        %1472 = vmatprep.subr.mxu0 0.0
        %1473 = vmatpush1.msra.mxu0 0.0
        %1474 = vmatprep.subr.mxu0 0.0
        %1475 = vmatpush1.msra.mxu0 0.0
        %1476 = vmatprep.subr.mxu0 0.0
        %1477 = vmatpush1.msra.mxu0 0.0
        %1478 = vmatprep.subr.mxu0 0.0
        %1479 = vmatpush1.msra.mxu0 0.0
        %1480 = vmatprep.subr.mxu0 0.0
        %1481 = vmatpush1.msra.mxu0 0.0
        %1482 = vmatprep.subr.mxu0 0.0
        %1483 = vmatpush1.msra.mxu0 0.0
        %1484 = vmatprep.subr.mxu0 0.0
        %1485 = vmatpush1.msra.mxu0 0.0
        %1486 = vmatprep.subr.mxu0 0.0
        %1487 = vmatpush1.msra.mxu0 0.0
        %1488 = vmatprep.subr.mxu0 0.0
        %1489 = vmatpush1.msra.mxu0 0.0
        %1490 = vmatprep.subr.mxu0 0.0
        %1491 = vmatpush1.msra.mxu0 0.0
        %1492 = vmatprep.subr.mxu0 0.0
        %1493 = vmatpush1.msra.mxu0 0.0
        %1494 = vmatprep.subr.mxu0 0.0
        %1495 = vmatpush1.msra.mxu0 %v1100
        %1496 = vmatprep.subr.mxu0 0.0
        %1497 = vmatpush2.msra.mxu0 0.0
        %1498 = vmatprep.subr.mxu0 0.0
        %1499 = vmatpush2.msra.mxu0 0.0
        %1500 = vmatprep.subr.mxu0 0.0
        %1501 = vmatpush2.msra.mxu0 0.0
        %1502 = vmatprep.subr.mxu0 0.0
        %1503 = vmatpush2.msra.mxu0 0.0
        %1504 = vmatprep.subr.mxu0 0.0
        %1505 = vmatpush2.msra.mxu0 0.0
        %1506 = vmatprep.subr.mxu0 0.0
        %1507 = vmatpush2.msra.mxu0 0.0
        %1508 = vmatprep.subr.mxu0 0.0
        %1509 = vmatpush2.msra.mxu0 0.0
        %1510 = vmatprep.subr.mxu0 0.0
        %1511 = vmatpush2.msra.mxu0 0.0
        %1512 = vmatprep.subr.mxu0 0.0
        %1513 = vmatpush2.msra.mxu0 0.0
        %1514 = vmatprep.subr.mxu0 0.0
        %1515 = vmatpush2.msra.mxu0 0.0
        %1516 = vmatprep.subr.mxu0 0.0
        %1517 = vmatpush2.msra.mxu0 0.0
        %1518 = vmatprep.subr.mxu0 0.0
        %1519 = vmatpush2.msra.mxu0 0.0
        %1520 = vmatprep.subr.mxu0 0.0
        %1521 = vmatpush2.msra.mxu0 0.0
        %1522 = vmatprep.subr.mxu0 0.0
        %1523 = vmatpush2.msra.mxu0 0.0
        %1524 = vmatprep.subr.mxu0 0.0
        %1525 = vmatpush2.msra.mxu0 0.0
        %1526 = vmatprep.subr.mxu0 0.0
        %1527 = vmatpush2.msra.mxu0 0.0
        %1528 = vmatprep.mubr.f32.mxu0 0.0
        %1529 = vmatmul.mubr.f32.gmra.mxu0 %v1462
        %v1530 = vpop.f32.mrf.mxu0
        %v1531 = vadd.f32 0.0, %v1530
        %v1532 = vpop.f32.mrf.mxu0
        %1533 = vdwg.mxu0
        %v1535 = vsel %vm1104, %v1454, 0
        %1537 = vmatprep.subr.mxu0 0.0
        %1538 = vmatpush1.msra.mxu0 0.0
        %1539 = vmatprep.subr.mxu0 0.0
        %1540 = vmatpush1.msra.mxu0 0.0
        %1541 = vmatprep.subr.mxu0 0.0
        %1542 = vmatpush1.msra.mxu0 0.0
        %1543 = vmatprep.subr.mxu0 0.0
        %1544 = vmatpush1.msra.mxu0 0.0
        %1545 = vmatprep.subr.mxu0 0.0
        %1546 = vmatpush1.msra.mxu0 0.0
        %1547 = vmatprep.subr.mxu0 0.0
        %1548 = vmatpush1.msra.mxu0 0.0
        %1549 = vmatprep.subr.mxu0 0.0
        %1550 = vmatpush1.msra.mxu0 0.0
        %1551 = vmatprep.subr.mxu0 0.0
        %1552 = vmatpush1.msra.mxu0 0.0
        %1553 = vmatprep.subr.mxu0 0.0
        %1554 = vmatpush1.msra.mxu0 0.0
        %1555 = vmatprep.subr.mxu0 0.0
        %1556 = vmatpush1.msra.mxu0 0.0
        %1557 = vmatprep.subr.mxu0 0.0
        %1558 = vmatpush1.msra.mxu0 0.0
        %1559 = vmatprep.subr.mxu0 0.0
        %1560 = vmatpush1.msra.mxu0 0.0
        %1561 = vmatprep.subr.mxu0 0.0
        %1562 = vmatpush1.msra.mxu0 0.0
        %1563 = vmatprep.subr.mxu0 0.0
        %1564 = vmatpush1.msra.mxu0 0.0
        %1565 = vmatprep.subr.mxu0 0.0
        %1566 = vmatpush1.msra.mxu0 0.0
        %1567 = vmatprep.subr.mxu0 0.0
        %1568 = vmatpush1.msra.mxu0 %v1101
        %1569 = vmatprep.subr.mxu0 0.0
        %1570 = vmatpush2.msra.mxu0 0.0
        %1571 = vmatprep.subr.mxu0 0.0
        %1572 = vmatpush2.msra.mxu0 0.0
        %1573 = vmatprep.subr.mxu0 0.0
        %1574 = vmatpush2.msra.mxu0 0.0
        %1575 = vmatprep.subr.mxu0 0.0
        %1576 = vmatpush2.msra.mxu0 0.0
        %1577 = vmatprep.subr.mxu0 0.0
        %1578 = vmatpush2.msra.mxu0 0.0
        %1579 = vmatprep.subr.mxu0 0.0
        %1580 = vmatpush2.msra.mxu0 0.0
        %1581 = vmatprep.subr.mxu0 0.0
        %1582 = vmatpush2.msra.mxu0 0.0
        %1583 = vmatprep.subr.mxu0 0.0
        %1584 = vmatpush2.msra.mxu0 0.0
        %1585 = vmatprep.subr.mxu0 0.0
        %1586 = vmatpush2.msra.mxu0 0.0
        %1587 = vmatprep.subr.mxu0 0.0
        %1588 = vmatpush2.msra.mxu0 0.0
        %1589 = vmatprep.subr.mxu0 0.0
        %1590 = vmatpush2.msra.mxu0 0.0
        %1591 = vmatprep.subr.mxu0 0.0
        %1592 = vmatpush2.msra.mxu0 0.0
        %1593 = vmatprep.subr.mxu0 0.0
        %1594 = vmatpush2.msra.mxu0 0.0
        %1595 = vmatprep.subr.mxu0 0.0
        %1596 = vmatpush2.msra.mxu0 0.0
        %1597 = vmatprep.subr.mxu0 0.0
        %1598 = vmatpush2.msra.mxu0 0.0
        %1599 = vmatprep.subr.mxu0 0.0
        %1600 = vmatpush2.msra.mxu0 0.0
        %1601 = vmatprep.mubr.f32.mxu0 0.0
        %1602 = vmatmul.mubr.f32.gmra.mxu0 %v1535
        %v1603 = vpop.f32.mrf.mxu0
        %v1604 = vadd.f32 0.0, %v1603
        %v1605 = vpop.f32.mrf.mxu0
        %1606 = vdwg.mxu0
        %v1608 = vsel %vm1104, %v1455, 0
        %1610 = vmatprep.subr.mxu0 0.0
        %1611 = vmatpush1.msra.mxu0 0.0
        %1612 = vmatprep.subr.mxu0 0.0
        %1613 = vmatpush1.msra.mxu0 0.0
        %1614 = vmatprep.subr.mxu0 0.0
        %1615 = vmatpush1.msra.mxu0 0.0
        %1616 = vmatprep.subr.mxu0 0.0
        %1617 = vmatpush1.msra.mxu0 0.0
        %1618 = vmatprep.subr.mxu0 0.0
        %1619 = vmatpush1.msra.mxu0 0.0
        %1620 = vmatprep.subr.mxu0 0.0
        %1621 = vmatpush1.msra.mxu0 0.0
        %1622 = vmatprep.subr.mxu0 0.0
        %1623 = vmatpush1.msra.mxu0 0.0
        %1624 = vmatprep.subr.mxu0 0.0
        %1625 = vmatpush1.msra.mxu0 0.0
        %1626 = vmatprep.subr.mxu0 0.0
        %1627 = vmatpush1.msra.mxu0 0.0
        %1628 = vmatprep.subr.mxu0 0.0
        %1629 = vmatpush1.msra.mxu0 0.0
        %1630 = vmatprep.subr.mxu0 0.0
        %1631 = vmatpush1.msra.mxu0 0.0
        %1632 = vmatprep.subr.mxu0 0.0
        %1633 = vmatpush1.msra.mxu0 0.0
        %1634 = vmatprep.subr.mxu0 0.0
        %1635 = vmatpush1.msra.mxu0 0.0
        %1636 = vmatprep.subr.mxu0 0.0
        %1637 = vmatpush1.msra.mxu0 0.0
        %1638 = vmatprep.subr.mxu0 0.0
        %1639 = vmatpush1.msra.mxu0 0.0
        %1640 = vmatprep.subr.mxu0 0.0
        %1641 = vmatpush1.msra.mxu0 %v1102
        %1642 = vmatprep.subr.mxu0 0.0
        %1643 = vmatpush2.msra.mxu0 0.0
        %1644 = vmatprep.subr.mxu0 0.0
        %1645 = vmatpush2.msra.mxu0 0.0
        %1646 = vmatprep.subr.mxu0 0.0
        %1647 = vmatpush2.msra.mxu0 0.0
        %1648 = vmatprep.subr.mxu0 0.0
        %1649 = vmatpush2.msra.mxu0 0.0
        %1650 = vmatprep.subr.mxu0 0.0
        %1651 = vmatpush2.msra.mxu0 0.0
        %1652 = vmatprep.subr.mxu0 0.0
        %1653 = vmatpush2.msra.mxu0 0.0
        %1654 = vmatprep.subr.mxu0 0.0
        %1655 = vmatpush2.msra.mxu0 0.0
        %1656 = vmatprep.subr.mxu0 0.0
        %1657 = vmatpush2.msra.mxu0 0.0
        %1658 = vmatprep.subr.mxu0 0.0
        %1659 = vmatpush2.msra.mxu0 0.0
        %1660 = vmatprep.subr.mxu0 0.0
        %1661 = vmatpush2.msra.mxu0 0.0
        %1662 = vmatprep.subr.mxu0 0.0
        %1663 = vmatpush2.msra.mxu0 0.0
        %1664 = vmatprep.subr.mxu0 0.0
        %1665 = vmatpush2.msra.mxu0 0.0
        %1666 = vmatprep.subr.mxu0 0.0
        %1667 = vmatpush2.msra.mxu0 0.0
        %1668 = vmatprep.subr.mxu0 0.0
        %1669 = vmatpush2.msra.mxu0 0.0
        %1670 = vmatprep.subr.mxu0 0.0
        %1671 = vmatpush2.msra.mxu0 0.0
        %1672 = vmatprep.subr.mxu0 0.0
        %1673 = vmatpush2.msra.mxu0 0.0
        %1674 = vmatprep.mubr.f32.mxu0 0.0
        %1675 = vmatmul.mubr.f32.gmra.mxu0 %v1608
        %v1676 = vpop.f32.mrf.mxu0
        %v1677 = vadd.f32 0.0, %v1676
        %v1678 = vpop.f32.mrf.mxu0
        %1679 = vdwg.mxu0
        %v1681 = vsel %vm1104, %v1456, 0
        %1683 = vmatprep.subr.mxu0 0.0
        %1684 = vmatpush1.msra.mxu0 0.0
        %1685 = vmatprep.subr.mxu0 0.0
        %1686 = vmatpush1.msra.mxu0 0.0
        %1687 = vmatprep.subr.mxu0 0.0
        %1688 = vmatpush1.msra.mxu0 0.0
        %1689 = vmatprep.subr.mxu0 0.0
        %1690 = vmatpush1.msra.mxu0 0.0
        %1691 = vmatprep.subr.mxu0 0.0
        %1692 = vmatpush1.msra.mxu0 0.0
        %1693 = vmatprep.subr.mxu0 0.0
        %1694 = vmatpush1.msra.mxu0 0.0
        %1695 = vmatprep.subr.mxu0 0.0
        %1696 = vmatpush1.msra.mxu0 0.0
        %1697 = vmatprep.subr.mxu0 0.0
        %1698 = vmatpush1.msra.mxu0 0.0
        %1699 = vmatprep.subr.mxu0 0.0
        %1700 = vmatpush1.msra.mxu0 0.0
        %1701 = vmatprep.subr.mxu0 0.0
        %1702 = vmatpush1.msra.mxu0 0.0
        %1703 = vmatprep.subr.mxu0 0.0
        %1704 = vmatpush1.msra.mxu0 0.0
        %1705 = vmatprep.subr.mxu0 0.0
        %1706 = vmatpush1.msra.mxu0 0.0
        %1707 = vmatprep.subr.mxu0 0.0
        %1708 = vmatpush1.msra.mxu0 0.0
        %1709 = vmatprep.subr.mxu0 0.0
        %1710 = vmatpush1.msra.mxu0 0.0
        %1711 = vmatprep.subr.mxu0 0.0
        %1712 = vmatpush1.msra.mxu0 0.0
        %1713 = vmatprep.subr.mxu0 0.0
        %1714 = vmatpush1.msra.mxu0 %v1103
        %1715 = vmatprep.subr.mxu0 0.0
        %1716 = vmatpush2.msra.mxu0 0.0
        %1717 = vmatprep.subr.mxu0 0.0
        %1718 = vmatpush2.msra.mxu0 0.0
        %1719 = vmatprep.subr.mxu0 0.0
        %1720 = vmatpush2.msra.mxu0 0.0
        %1721 = vmatprep.subr.mxu0 0.0
        %1722 = vmatpush2.msra.mxu0 0.0
        %1723 = vmatprep.subr.mxu0 0.0
        %1724 = vmatpush2.msra.mxu0 0.0
        %1725 = vmatprep.subr.mxu0 0.0
        %1726 = vmatpush2.msra.mxu0 0.0
        %1727 = vmatprep.subr.mxu0 0.0
        %1728 = vmatpush2.msra.mxu0 0.0
        %1729 = vmatprep.subr.mxu0 0.0
        %1730 = vmatpush2.msra.mxu0 0.0
        %1731 = vmatprep.subr.mxu0 0.0
        %1732 = vmatpush2.msra.mxu0 0.0
        %1733 = vmatprep.subr.mxu0 0.0
        %1734 = vmatpush2.msra.mxu0 0.0
        %1735 = vmatprep.subr.mxu0 0.0
        %1736 = vmatpush2.msra.mxu0 0.0
        %1737 = vmatprep.subr.mxu0 0.0
        %1738 = vmatpush2.msra.mxu0 0.0
        %1739 = vmatprep.subr.mxu0 0.0
        %1740 = vmatpush2.msra.mxu0 0.0
        %1741 = vmatprep.subr.mxu0 0.0
        %1742 = vmatpush2.msra.mxu0 0.0
        %1743 = vmatprep.subr.mxu0 0.0
        %1744 = vmatpush2.msra.mxu0 0.0
        %1745 = vmatprep.subr.mxu0 0.0
        %1746 = vmatpush2.msra.mxu0 0.0
        %1747 = vmatprep.mubr.f32.mxu0 0.0
        %1748 = vmatmul.mubr.f32.gmra.mxu0 %v1681
        %v1749 = vpop.f32.mrf.mxu0
        %v1750 = vadd.f32 0.0, %v1749
        %v1751 = vpop.f32.mrf.mxu0
        %1752 = vdwg.mxu0
        %v1753 = vld [vmem:[#allocation10] sm:$0xff]
        %v1754 = vld [vmem:[#allocation10 + $0x8] sm:$0xff]
        %v1755 = vld [vmem:[#allocation10 + $0x10] sm:$0xff]
        %v1756 = vld [vmem:[#allocation10 + $0x18] sm:$0xff]
        %v1758 = vsel %vm1104, %v1531, 0
        %1760 = vmatprep.subr.mxu0 0.0
        %1761 = vmatpush1.msra.mxu0 0.0
        %1762 = vmatprep.subr.mxu0 0.0
        %1763 = vmatpush1.msra.mxu0 0.0
        %1764 = vmatprep.subr.mxu0 0.0
        %1765 = vmatpush1.msra.mxu0 0.0
        %1766 = vmatprep.subr.mxu0 0.0
        %1767 = vmatpush1.msra.mxu0 0.0
        %1768 = vmatprep.subr.mxu0 0.0
        %1769 = vmatpush1.msra.mxu0 0.0
        %1770 = vmatprep.subr.mxu0 0.0
        %1771 = vmatpush1.msra.mxu0 0.0
        %1772 = vmatprep.subr.mxu0 0.0
        %1773 = vmatpush1.msra.mxu0 0.0
        %1774 = vmatprep.subr.mxu0 0.0
        %1775 = vmatpush1.msra.mxu0 0.0
        %1776 = vmatprep.subr.mxu0 0.0
        %1777 = vmatpush1.msra.mxu0 0.0
        %1778 = vmatprep.subr.mxu0 0.0
        %1779 = vmatpush1.msra.mxu0 0.0
        %1780 = vmatprep.subr.mxu0 0.0
        %1781 = vmatpush1.msra.mxu0 0.0
        %1782 = vmatprep.subr.mxu0 0.0
        %1783 = vmatpush1.msra.mxu0 0.0
        %1784 = vmatprep.subr.mxu0 0.0
        %1785 = vmatpush1.msra.mxu0 0.0
        %1786 = vmatprep.subr.mxu0 0.0
        %1787 = vmatpush1.msra.mxu0 0.0
        %1788 = vmatprep.subr.mxu0 0.0
        %1789 = vmatpush1.msra.mxu0 0.0
        %1790 = vmatprep.subr.mxu0 0.0
        %1791 = vmatpush1.msra.mxu0 %v1753
        %1792 = vmatprep.subr.mxu0 0.0
        %1793 = vmatpush2.msra.mxu0 0.0
        %1794 = vmatprep.subr.mxu0 0.0
        %1795 = vmatpush2.msra.mxu0 0.0
        %1796 = vmatprep.subr.mxu0 0.0
        %1797 = vmatpush2.msra.mxu0 0.0
        %1798 = vmatprep.subr.mxu0 0.0
        %1799 = vmatpush2.msra.mxu0 0.0
        %1800 = vmatprep.subr.mxu0 0.0
        %1801 = vmatpush2.msra.mxu0 0.0
        %1802 = vmatprep.subr.mxu0 0.0
        %1803 = vmatpush2.msra.mxu0 0.0
        %1804 = vmatprep.subr.mxu0 0.0
        %1805 = vmatpush2.msra.mxu0 0.0
        %1806 = vmatprep.subr.mxu0 0.0
        %1807 = vmatpush2.msra.mxu0 0.0
        %1808 = vmatprep.subr.mxu0 0.0
        %1809 = vmatpush2.msra.mxu0 0.0
        %1810 = vmatprep.subr.mxu0 0.0
        %1811 = vmatpush2.msra.mxu0 0.0
        %1812 = vmatprep.subr.mxu0 0.0
        %1813 = vmatpush2.msra.mxu0 0.0
        %1814 = vmatprep.subr.mxu0 0.0
        %1815 = vmatpush2.msra.mxu0 0.0
        %1816 = vmatprep.subr.mxu0 0.0
        %1817 = vmatpush2.msra.mxu0 0.0
        %1818 = vmatprep.subr.mxu0 0.0
        %1819 = vmatpush2.msra.mxu0 0.0
        %1820 = vmatprep.subr.mxu0 0.0
        %1821 = vmatpush2.msra.mxu0 0.0
        %1822 = vmatprep.subr.mxu0 0.0
        %1823 = vmatpush2.msra.mxu0 0.0
        %1824 = vmatprep.mubr.f32.mxu0 0.0
        %1825 = vmatmul.mubr.f32.gmra.mxu0 %v1758
        %v1826 = vpop.f32.mrf.mxu0
        %v1827 = vadd.f32 0.0, %v1826
        %v1828 = vpop.f32.mrf.mxu0
        %1829 = vdwg.mxu0
        %v1831 = vsel %vm1104, %v1604, 0
        %1833 = vmatprep.subr.mxu0 0.0
        %1834 = vmatpush1.msra.mxu0 0.0
        %1835 = vmatprep.subr.mxu0 0.0
        %1836 = vmatpush1.msra.mxu0 0.0
        %1837 = vmatprep.subr.mxu0 0.0
        %1838 = vmatpush1.msra.mxu0 0.0
        %1839 = vmatprep.subr.mxu0 0.0
        %1840 = vmatpush1.msra.mxu0 0.0
        %1841 = vmatprep.subr.mxu0 0.0
        %1842 = vmatpush1.msra.mxu0 0.0
        %1843 = vmatprep.subr.mxu0 0.0
        %1844 = vmatpush1.msra.mxu0 0.0
        %1845 = vmatprep.subr.mxu0 0.0
        %1846 = vmatpush1.msra.mxu0 0.0
        %1847 = vmatprep.subr.mxu0 0.0
        %1848 = vmatpush1.msra.mxu0 0.0
        %1849 = vmatprep.subr.mxu0 0.0
        %1850 = vmatpush1.msra.mxu0 0.0
        %1851 = vmatprep.subr.mxu0 0.0
        %1852 = vmatpush1.msra.mxu0 0.0
        %1853 = vmatprep.subr.mxu0 0.0
        %1854 = vmatpush1.msra.mxu0 0.0
        %1855 = vmatprep.subr.mxu0 0.0
        %1856 = vmatpush1.msra.mxu0 0.0
        %1857 = vmatprep.subr.mxu0 0.0
        %1858 = vmatpush1.msra.mxu0 0.0
        %1859 = vmatprep.subr.mxu0 0.0
        %1860 = vmatpush1.msra.mxu0 0.0
        %1861 = vmatprep.subr.mxu0 0.0
        %1862 = vmatpush1.msra.mxu0 0.0
        %1863 = vmatprep.subr.mxu0 0.0
        %1864 = vmatpush1.msra.mxu0 %v1754
        %1865 = vmatprep.subr.mxu0 0.0
        %1866 = vmatpush2.msra.mxu0 0.0
        %1867 = vmatprep.subr.mxu0 0.0
        %1868 = vmatpush2.msra.mxu0 0.0
        %1869 = vmatprep.subr.mxu0 0.0
        %1870 = vmatpush2.msra.mxu0 0.0
        %1871 = vmatprep.subr.mxu0 0.0
        %1872 = vmatpush2.msra.mxu0 0.0
        %1873 = vmatprep.subr.mxu0 0.0
        %1874 = vmatpush2.msra.mxu0 0.0
        %1875 = vmatprep.subr.mxu0 0.0
        %1876 = vmatpush2.msra.mxu0 0.0
        %1877 = vmatprep.subr.mxu0 0.0
        %1878 = vmatpush2.msra.mxu0 0.0
        %1879 = vmatprep.subr.mxu0 0.0
        %1880 = vmatpush2.msra.mxu0 0.0
        %1881 = vmatprep.subr.mxu0 0.0
        %1882 = vmatpush2.msra.mxu0 0.0
        %1883 = vmatprep.subr.mxu0 0.0
        %1884 = vmatpush2.msra.mxu0 0.0
        %1885 = vmatprep.subr.mxu0 0.0
        %1886 = vmatpush2.msra.mxu0 0.0
        %1887 = vmatprep.subr.mxu0 0.0
        %1888 = vmatpush2.msra.mxu0 0.0
        %1889 = vmatprep.subr.mxu0 0.0
        %1890 = vmatpush2.msra.mxu0 0.0
        %1891 = vmatprep.subr.mxu0 0.0
        %1892 = vmatpush2.msra.mxu0 0.0
        %1893 = vmatprep.subr.mxu0 0.0
        %1894 = vmatpush2.msra.mxu0 0.0
        %1895 = vmatprep.subr.mxu0 0.0
        %1896 = vmatpush2.msra.mxu0 0.0
        %1897 = vmatprep.mubr.f32.mxu0 0.0
        %1898 = vmatmul.mubr.f32.gmra.mxu0 %v1831
        %v1899 = vpop.f32.mrf.mxu0
        %v1900 = vadd.f32 0.0, %v1899
        %v1901 = vpop.f32.mrf.mxu0
        %1902 = vdwg.mxu0
        %v1904 = vsel %vm1104, %v1677, 0
        %1906 = vmatprep.subr.mxu0 0.0
        %1907 = vmatpush1.msra.mxu0 0.0
        %1908 = vmatprep.subr.mxu0 0.0
        %1909 = vmatpush1.msra.mxu0 0.0
        %1910 = vmatprep.subr.mxu0 0.0
        %1911 = vmatpush1.msra.mxu0 0.0
        %1912 = vmatprep.subr.mxu0 0.0
        %1913 = vmatpush1.msra.mxu0 0.0
        %1914 = vmatprep.subr.mxu0 0.0
        %1915 = vmatpush1.msra.mxu0 0.0
        %1916 = vmatprep.subr.mxu0 0.0
        %1917 = vmatpush1.msra.mxu0 0.0
        %1918 = vmatprep.subr.mxu0 0.0
        %1919 = vmatpush1.msra.mxu0 0.0
        %1920 = vmatprep.subr.mxu0 0.0
        %1921 = vmatpush1.msra.mxu0 0.0
        %1922 = vmatprep.subr.mxu0 0.0
        %1923 = vmatpush1.msra.mxu0 0.0
        %1924 = vmatprep.subr.mxu0 0.0
        %1925 = vmatpush1.msra.mxu0 0.0
        %1926 = vmatprep.subr.mxu0 0.0
        %1927 = vmatpush1.msra.mxu0 0.0
        %1928 = vmatprep.subr.mxu0 0.0
        %1929 = vmatpush1.msra.mxu0 0.0
        %1930 = vmatprep.subr.mxu0 0.0
        %1931 = vmatpush1.msra.mxu0 0.0
        %1932 = vmatprep.subr.mxu0 0.0
        %1933 = vmatpush1.msra.mxu0 0.0
        %1934 = vmatprep.subr.mxu0 0.0
        %1935 = vmatpush1.msra.mxu0 0.0
        %1936 = vmatprep.subr.mxu0 0.0
        %1937 = vmatpush1.msra.mxu0 %v1755
        %1938 = vmatprep.subr.mxu0 0.0
        %1939 = vmatpush2.msra.mxu0 0.0
        %1940 = vmatprep.subr.mxu0 0.0
        %1941 = vmatpush2.msra.mxu0 0.0
        %1942 = vmatprep.subr.mxu0 0.0
        %1943 = vmatpush2.msra.mxu0 0.0
        %1944 = vmatprep.subr.mxu0 0.0
        %1945 = vmatpush2.msra.mxu0 0.0
        %1946 = vmatprep.subr.mxu0 0.0
        %1947 = vmatpush2.msra.mxu0 0.0
        %1948 = vmatprep.subr.mxu0 0.0
        %1949 = vmatpush2.msra.mxu0 0.0
        %1950 = vmatprep.subr.mxu0 0.0
        %1951 = vmatpush2.msra.mxu0 0.0
        %1952 = vmatprep.subr.mxu0 0.0
        %1953 = vmatpush2.msra.mxu0 0.0
        %1954 = vmatprep.subr.mxu0 0.0
        %1955 = vmatpush2.msra.mxu0 0.0
        %1956 = vmatprep.subr.mxu0 0.0
        %1957 = vmatpush2.msra.mxu0 0.0
        %1958 = vmatprep.subr.mxu0 0.0
        %1959 = vmatpush2.msra.mxu0 0.0
        %1960 = vmatprep.subr.mxu0 0.0
        %1961 = vmatpush2.msra.mxu0 0.0
        %1962 = vmatprep.subr.mxu0 0.0
        %1963 = vmatpush2.msra.mxu0 0.0
        %1964 = vmatprep.subr.mxu0 0.0
        %1965 = vmatpush2.msra.mxu0 0.0
        %1966 = vmatprep.subr.mxu0 0.0
        %1967 = vmatpush2.msra.mxu0 0.0
        %1968 = vmatprep.subr.mxu0 0.0
        %1969 = vmatpush2.msra.mxu0 0.0
        %1970 = vmatprep.mubr.f32.mxu0 0.0
        %1971 = vmatmul.mubr.f32.gmra.mxu0 %v1904
        %v1972 = vpop.f32.mrf.mxu0
        %v1973 = vadd.f32 0.0, %v1972
        %v1974 = vpop.f32.mrf.mxu0
        %1975 = vdwg.mxu0
        %v1977 = vsel %vm1104, %v1750, 0
        %1979 = vmatprep.subr.mxu0 0.0
        %1980 = vmatpush1.msra.mxu0 0.0
        %1981 = vmatprep.subr.mxu0 0.0
        %1982 = vmatpush1.msra.mxu0 0.0
        %1983 = vmatprep.subr.mxu0 0.0
        %1984 = vmatpush1.msra.mxu0 0.0
        %1985 = vmatprep.subr.mxu0 0.0
        %1986 = vmatpush1.msra.mxu0 0.0
        %1987 = vmatprep.subr.mxu0 0.0
        %1988 = vmatpush1.msra.mxu0 0.0
        %1989 = vmatprep.subr.mxu0 0.0
        %1990 = vmatpush1.msra.mxu0 0.0
        %1991 = vmatprep.subr.mxu0 0.0
        %1992 = vmatpush1.msra.mxu0 0.0
        %1993 = vmatprep.subr.mxu0 0.0
        %1994 = vmatpush1.msra.mxu0 0.0
        %1995 = vmatprep.subr.mxu0 0.0
        %1996 = vmatpush1.msra.mxu0 0.0
        %1997 = vmatprep.subr.mxu0 0.0
        %1998 = vmatpush1.msra.mxu0 0.0
        %1999 = vmatprep.subr.mxu0 0.0
        %2000 = vmatpush1.msra.mxu0 0.0
        %2001 = vmatprep.subr.mxu0 0.0
        %2002 = vmatpush1.msra.mxu0 0.0
        %2003 = vmatprep.subr.mxu0 0.0
        %2004 = vmatpush1.msra.mxu0 0.0
        %2005 = vmatprep.subr.mxu0 0.0
        %2006 = vmatpush1.msra.mxu0 0.0
        %2007 = vmatprep.subr.mxu0 0.0
        %2008 = vmatpush1.msra.mxu0 0.0
        %2009 = vmatprep.subr.mxu0 0.0
        %2010 = vmatpush1.msra.mxu0 %v1756
        %2011 = vmatprep.subr.mxu0 0.0
        %2012 = vmatpush2.msra.mxu0 0.0
        %2013 = vmatprep.subr.mxu0 0.0
        %2014 = vmatpush2.msra.mxu0 0.0
        %2015 = vmatprep.subr.mxu0 0.0
        %2016 = vmatpush2.msra.mxu0 0.0
        %2017 = vmatprep.subr.mxu0 0.0
        %2018 = vmatpush2.msra.mxu0 0.0
        %2019 = vmatprep.subr.mxu0 0.0
        %2020 = vmatpush2.msra.mxu0 0.0
        %2021 = vmatprep.subr.mxu0 0.0
        %2022 = vmatpush2.msra.mxu0 0.0
        %2023 = vmatprep.subr.mxu0 0.0
        %2024 = vmatpush2.msra.mxu0 0.0
        %2025 = vmatprep.subr.mxu0 0.0
        %2026 = vmatpush2.msra.mxu0 0.0
        %2027 = vmatprep.subr.mxu0 0.0
        %2028 = vmatpush2.msra.mxu0 0.0
        %2029 = vmatprep.subr.mxu0 0.0
        %2030 = vmatpush2.msra.mxu0 0.0
        %2031 = vmatprep.subr.mxu0 0.0
        %2032 = vmatpush2.msra.mxu0 0.0
        %2033 = vmatprep.subr.mxu0 0.0
        %2034 = vmatpush2.msra.mxu0 0.0
        %2035 = vmatprep.subr.mxu0 0.0
        %2036 = vmatpush2.msra.mxu0 0.0
        %2037 = vmatprep.subr.mxu0 0.0
        %2038 = vmatpush2.msra.mxu0 0.0
        %2039 = vmatprep.subr.mxu0 0.0
        %2040 = vmatpush2.msra.mxu0 0.0
        %2041 = vmatprep.subr.mxu0 0.0
        %2042 = vmatpush2.msra.mxu0 0.0
        %2043 = vmatprep.mubr.f32.mxu0 0.0
        %2044 = vmatmul.mubr.f32.gmra.mxu0 %v1977
        %v2045 = vpop.f32.mrf.mxu0
        %v2046 = vadd.f32 0.0, %v2045
        %v2047 = vpop.f32.mrf.mxu0
        %2048 = vdwg.mxu0
        %v2049 = vsel %vm506, %v1827, 0.0
        %v2050 = vsel %vm506, %v1900, 0.0
        %v2051 = vadd.f32 %v2049, %v2050
        %v2052 = vsel %vm506, %v1973, 0.0
        %v2053 = vadd.f32 %v2051, %v2052
        %v2054 = vsel %vm506, %v2046, 0.0
        %v2055 = vadd.f32 %v2053, %v2054
        %v2056 = vld [vmem:[%s7] sm:$0x1]
        %v2058 = vlaneseq
        %v2059 = vshrl.u32 %v2058, 7
        %v2060 = vsub.s32 0, %v2059
        %v2061 = vrot.slane %v2056, %v2060
        %v2063 = vadd.f32 %v2055, %v2061
        %v2064 = vadd.f32 %v2063, %v493
        %v2065 = vsel %vm506, %v2064, 0.0
        %2066 = vadd.xlane.f32.xlu0 %v2065
        %v2067 = vpop.xlane.xlu0 %2066
        %v2068 = vrcp.pop 32.0
        %v2069 = vmul.f32 %v2067, %v2068
        %v2070 = vsub.f32 %v2064, %v2069
        %v2071 = vmul.f32 %v2070, %v2070
        %v2072 = vsel %vm506, %v2071, 0.0
        %2073 = vadd.xlane.f32.xlu0 %v2072
        %v2074 = vpop.xlane.xlu0 %2073
        %v2075 = vmul.f32 %v2074, %v2068
        %v2076 = vadd.f32 %v2075, 1e-12
        %v2077 = vrsqrt.pop %v2076
        %v2078 = vmul.f32 %v2070, %v2077
        %v2079 = vld [vmem:[%s8] sm:$0x1]
        %v2081 = vlaneseq
        %v2082 = vshrl.u32 %v2081, 7
        %v2083 = vsub.s32 0, %v2082
        %v2084 = vrot.slane %v2079, %v2083
        %v2086 = vmul.f32 %v2084, %v2078
        %v2087 = vld [vmem:[%s9] sm:$0x1]
        %v2089 = vlaneseq
        %v2090 = vshrl.u32 %v2089, 7
        %v2091 = vsub.s32 0, %v2090
        %v2092 = vrot.slane %v2087, %v2091
        %v2094 = vadd.f32 %v2086, %v2092
        %2095 = vst.msk [vmem:[%s485] sm:$0xff] %vm506, %v2094
        %s2096 = sand.u32 %s264, 1
        %s2097 = scalar_lea.sflag [#allocation4], %s2096
        %s2098 = sand.u32 %s264, 1
        %s2099 = smul.addr %s2098, 8
        %s2100 = scalar_lea.vmem [#allocation11], %s2099
        %s2101 = sand.u32 %s290, 1
        %s2102 = scalar_lea.sflag [#allocation13], %s2101
        %s2103 = sand.u32 %s290, 1
        %s2104 = smul.addr %s2103, 32
        %s2105 = scalar_lea.vmem [#allocation12], %s2104
        // Predicated region
        $region81: #{tpu_custom_call.1} parent=59 // pred_check
          %p2106 = pneg %p274
        $region82: #{tpu_custom_call.1} parent=59 // pred_check_branch
          %2108 = sbr.rel (%p2106) target = $region84
        $region83: #{tpu_custom_call.1} parent=59 // pred_region
          %s2110 = ssub.s32 128, 128
          %2111 = vsyncadd %s2097, %s2110
          %s2112 = smul.addr %s36, 128
          %s2113 = scalar_lea.hbm %s10, %s2112
          %s2115 = sshll.u32 %s2100, 4
          %s2116 = int_to_ptr.vmem [resolvable:$true] %s2115
          %2118 = dma.vmem_to_hbm [thread:$0]  %s2116, 128, %s2113, %s2097
        $region84: #{tpu_custom_call.1} parent=59 // pred_fallthru
          _
        // Predicated region
        $region85: #{tpu_custom_call.1} parent=59 // pred_check
          %p2119 = pneg %p300
        $region86: #{tpu_custom_call.1} parent=59 // pred_check_branch
          %2121 = sbr.rel (%p2119) target = $region88
        $region87: #{tpu_custom_call.1} parent=59 // pred_region
          %s2123 = ssub.s32 512, 512
          %2124 = vsyncadd %s2102, %s2123
          %s2125 = smul.addr %s36, 4
          %s2126 = smul.addr %s2125, 128
          %s2127 = scalar_lea.hbm %s11, %s2126
          %s2128 = sshll.u32 %s2105, 4
          %s2129 = int_to_ptr.vmem [resolvable:$true] %s2128
          %2134 = dma.vmem_to_hbm [thread:$0]  %s2129, 512, %s2127, %s2102, 128, 128, 8
        $region88: #{tpu_custom_call.1} parent=59 // pred_fallthru
          _
      $region60: #{tpu_custom_call.1} parent=5 // pred_fallthru
        _
      %p2135 = scmp.le.s32.totalorder 2, %s31
      // Predicated region
      $region89: #{tpu_custom_call.1} parent=5 // pred_check
        %p2136 = pneg %p2135
      $region90: #{tpu_custom_call.1} parent=5 // pred_check_branch
        %2138 = sbr.rel (%p2136) target = $region92
      $region91: #{tpu_custom_call.1} parent=5 // pred_region
        %s2139 = ssub.s32 %s31, 2
        // Predicated region
        $region93: #{tpu_custom_call.1} parent=91 // pred_check
          %p2140 = pneg %p280
        $region94: #{tpu_custom_call.1} parent=91 // pred_check_branch
          %2142 = sbr.rel (%p2140) target = $region96
        $region95: #{tpu_custom_call.1} parent=91 // pred_region
          %s2143 = sand.u32 %s265, 1
          %s2144 = scalar_lea.sflag [#allocation4], %s2143
          %s2145 = sand.u32 %s265, 1
          %s2146 = smul.addr %s2145, 8
          %s2147 = scalar_lea.vmem [#allocation11], %s2146
          %2148 = dma.done %s2144, 128
        $region96: #{tpu_custom_call.1} parent=91 // pred_fallthru
          _
        // Predicated region
        $region97: #{tpu_custom_call.1} parent=91 // pred_check
          %p2149 = pneg %p306
        $region98: #{tpu_custom_call.1} parent=91 // pred_check_branch
          %2151 = sbr.rel (%p2149) target = $region100
        $region99: #{tpu_custom_call.1} parent=91 // pred_region
          %s2152 = sand.u32 %s291, 1
          %s2153 = scalar_lea.sflag [#allocation13], %s2152
          %s2154 = sand.u32 %s291, 1
          %s2155 = smul.addr %s2154, 32
          %s2156 = scalar_lea.vmem [#allocation12], %s2155
          %2157 = dma.done %s2153, 512
        $region100: #{tpu_custom_call.1} parent=91 // pred_fallthru
          _
      $region92: #{tpu_custom_call.1} parent=5 // pred_fallthru
        _
    $region6: #{tpu_custom_call.1} parent=1 // loop_footer
      %s35 = sadd.s32 1, %s31
    $region7: #{tpu_custom_call.1} parent=1 // loop_footer_branch
      %30 = sbr.rel target = $region3
    $region8: #{tpu_custom_call.1} parent=1 // loop_exit
      _
    %2158 = vsyncpa [#allocation3], 1
    %s2159 = scalar_lea.sflag [#allocation3], 1
    %2160 = vsyncpa %s2159, 1
    %2161 = vsyncpa [#allocation6], 1
    %s2162 = scalar_lea.sflag [#allocation6], 1
    %2163 = vsyncpa %s2162, 1
    %2164 = vsyncpa [#allocation9], 1
    %2165 = vsyncpa [#allocation4], 1
    %s2166 = scalar_lea.sflag [#allocation4], 1
    %2167 = vsyncpa %s2166, 1
    %2168 = vsyncpa [#allocation13], 1
    %s2169 = scalar_lea.sflag [#allocation13], 1
    %2170 = vsyncpa %s2169, 1

</llo_original>
